<compile_context>
chip_gen: v6e
topology: v6e:2x2x1
jax: 0.10.0
libtpu: 0.0.40
codegen_flags: <defaults>
</compile_context>

<pallas_src>
import jax
import jax.numpy as jnp
from jax.experimental import pallas as pl
from jax.experimental.pallas import tpu as pltpu

# ------------------------------------------------------------------ sizes
N = 2            # batch
C, H, W = 4, 16, 16
D_IN = C * H * W             # 1024 flattened image features
HID_E = 256                  # encoder hidden
LATENT = 64                  # VAE.latent_dim
HID_D = 256                  # decoder hidden
D_OUT = D_IN                 # decoder reconstructs the image
HEAD = 2 * LATENT            # fused mu||logvar head width (lane-dense: 128)


# ------------------------------------------------------------------ kernel
def vae_kernel(x_ref, eps_ref,
               w1_ref, b1_ref, whead_ref, bhead_ref,
               wd1_ref, bd1_ref, wd2_ref, bd2_ref,
               head_ref, out_ref):
    # ---- encoder: Linear -> ReLU -> fused {mu, logvar} Linear (128-wide)
    x = x_ref[...].astype(jnp.bfloat16)                              # (TM, D_IN)
    h = jnp.dot(x, w1_ref[...], preferred_element_type=jnp.float32) + b1_ref[...]
    h = jnp.maximum(h, 0.0)

    head = jnp.dot(h.astype(jnp.bfloat16), whead_ref[...],
                   preferred_element_type=jnp.float32) + bhead_ref[...]   # (TM, 128)
    mu = head[:, :LATENT]
    logvar = head[:, LATENT:]

    # ---- reparametrize: std = exp(logvar / 2); z = mu + std * eps
    std = jnp.exp(logvar * 0.5)
    z = mu + std * eps_ref[...]

    # ---- decoder on z (== z.view(-1, 64, 1, 1) fed to a 1x1-input deconv):
    #      Linear -> ReLU -> Linear -> sigmoid
    hd = jnp.dot(z.astype(jnp.bfloat16), wd1_ref[...],
                 preferred_element_type=jnp.float32) + bd1_ref[...]
    hd = jnp.maximum(hd, 0.0)
    y = jnp.dot(hd.astype(jnp.bfloat16), wd2_ref[...],
                preferred_element_type=jnp.float32) + bd2_ref[...]
    # sigmoid via EUP (exp + approximate reciprocal) instead of a VALU divide
    recon = pl.reciprocal(1.0 + jnp.exp(-y), approx=True)

    head_ref[...] = head          # lane-dense (TM, 128) mu||logvar slab
    out_ref[...] = recon          # lane-dense (TM, 1024)


# ------------------------------------------------------------------ wrapper
def vae_forward(state_nchw, eps, params):
    """state_nchw: (N, C, H, W) float32; eps: (N, LATENT) float32."""
    n, c, h, w = state_nchw.shape
    d_in = c * h * w
    x_flat = state_nchw.reshape(n, d_in)

    (w1, b1, wmu, bmu, wlv, blv, wd1, bd1, wd2, bd2) = params
    # fuse the two 64-wide heads into one 128-wide (lane-dense) matmul
    whead = jnp.concatenate([wmu, wlv], axis=1)                      # (HID_E, 128)
    bhead = jnp.concatenate([bmu, blv], axis=1)                      # (1, 128)

    # pad batch to a multiple of 8 sublanes / the batch tile
    tm = 128 if n % 128 == 0 else 8
    n_pad = pl.cdiv(n, tm) * tm
    if n_pad != n:
        pad = ((0, n_pad - n), (0, 0))
        x_flat = jnp.pad(x_flat, pad)
        eps = jnp.pad(eps, pad)
    grid = (n_pad // tm,)

    def row_block(width):
        return pl.BlockSpec((tm, width), lambda i: (i, 0))

    def pinned(shape):
        # full weight/bias block, same block index every grid step -> Pallas
        # keeps it resident in VMEM (no re-DMA across batch tiles)
        return pl.BlockSpec(shape, lambda i: (0, 0))

    flops = 2 * n_pad * (D_IN * HID_E + HID_E * HEAD + LATENT * HID_D + HID_D * D_OUT)
    transcendentals = n_pad * (LATENT + D_OUT)
    weight_bytes = 2 * (D_IN * HID_E + HID_E * HEAD + LATENT * HID_D + HID_D * D_OUT)
    bias_bytes = 4 * (HID_E + HEAD + HID_D + D_OUT)
    act_bytes = 4 * n_pad * (D_IN + LATENT + HEAD + D_OUT)
    cost = pl.CostEstimate(flops=flops, transcendentals=transcendentals,
                           bytes_accessed=weight_bytes + bias_bytes + act_bytes)

    head_out, recon_flat = pl.pallas_call(
        vae_kernel,
        out_shape=(
            jax.ShapeDtypeStruct((n_pad, HEAD), jnp.float32),
            jax.ShapeDtypeStruct((n_pad, D_OUT), jnp.float32),
        ),
        grid=grid,
        in_specs=[
            row_block(d_in),                      # x
            row_block(LATENT),                    # eps
            pinned((D_IN, HID_E)),                # w1   (bf16)
            pinned((1, HID_E)),                   # b1
            pinned((HID_E, HEAD)),                # whead (bf16)
            pinned((1, HEAD)),                    # bhead
            pinned((LATENT, HID_D)),              # wd1  (bf16)
            pinned((1, HID_D)),                   # bd1
            pinned((HID_D, D_OUT)),               # wd2  (bf16)
            pinned((1, D_OUT)),                   # bd2
        ],
        out_specs=(
            row_block(HEAD),
            row_block(D_OUT),
        ),
        compiler_params=pltpu.CompilerParams(
            dimension_semantics=("parallel",)),
        cost_estimate=cost,
    )(x_flat, eps, w1, b1, whead, bhead, wd1, bd1, wd2, bd2)

    mu = head_out[:n, :LATENT]
    logvar = head_out[:n, LATENT:]
    recon = recon_flat[:n].reshape(n, c, h, w)
    return recon, mu, logvar


# ------------------------------------------------------------------ params
def init_params(key):
    ks = jax.random.split(key, 6)
    scale = 0.02

    def lin(k, fan_in, fan_out):
        # weights kept in bf16: kernel is HBM-BW bound on weight DMA
        return (scale * jax.random.normal(k, (fan_in, fan_out), jnp.float32)
                ).astype(jnp.bfloat16)

    w1 = lin(ks[0], D_IN, HID_E)
    b1 = jnp.zeros((1, HID_E), jnp.float32)
    wmu = lin(ks[1], HID_E, LATENT)
    bmu = jnp.zeros((1, LATENT), jnp.float32)
    wlv = lin(ks[2], HID_E, LATENT)
    blv = jnp.zeros((1, LATENT), jnp.float32)
    wd1 = lin(ks[3], LATENT, HID_D)
    bd1 = jnp.zeros((1, HID_D), jnp.float32)
    wd2 = lin(ks[4], HID_D, D_OUT)
    bd2 = jnp.zeros((1, D_OUT), jnp.float32)
    return (w1, b1, wmu, bmu, wlv, blv, wd1, bd1, wd2, bd2)


# ------------------------------------------------------------------ main
if __name__ == "__main__":
    key = jax.random.PRNGKey(0)
    k_x, k_eps, k_p = jax.random.split(key, 3)

    state = jax.random.normal(k_x, (N, C, H, W), jnp.float32)
    # reparametrize samples eps ~ N(0, 1); drawn deterministically here (glue).
    eps = jax.random.normal(k_eps, (N, LATENT), jnp.float32)
    params = init_params(k_p)

    recon, mu, logvar = jax.jit(vae_forward)(state, eps, params)
    jax.block_until_ready((recon, mu, logvar))

    assert recon.shape == (N, C, H, W)
    assert mu.shape == (N, LATENT) and logvar.shape == (N, LATENT)
    assert bool(jnp.all(jnp.isfinite(recon)))
    assert bool(jnp.all(recon >= 0.0)) and bool(jnp.all(recon <= 1.0))
    print("KERNEL_OK")
</pallas_src>

<mosaic_0001>
module attributes {stable_mosaic.version = 11 : i64} {
  func.func @vae_kernel(%arg0: i32, %arg1: memref<8x1024xf32, #tpu.memory_space<vmem>>, %arg2: memref<8x64xf32, #tpu.memory_space<vmem>>, %arg3: memref<1024x256xbf16, #tpu.memory_space<vmem>>, %arg4: memref<1x256xf32, #tpu.memory_space<vmem>>, %arg5: memref<256x128xbf16, #tpu.memory_space<vmem>>, %arg6: memref<1x128xf32, #tpu.memory_space<vmem>>, %arg7: memref<64x256xbf16, #tpu.memory_space<vmem>>, %arg8: memref<1x256xf32, #tpu.memory_space<vmem>>, %arg9: memref<256x1024xbf16, #tpu.memory_space<vmem>>, %arg10: memref<1x1024xf32, #tpu.memory_space<vmem>>, %arg11: memref<8x128xf32, #tpu.memory_space<vmem>>, %arg12: memref<8x1024xf32, #tpu.memory_space<vmem>>) attributes {dimension_semantics = [#tpu.dimension_semantics<parallel>], iteration_bounds = array<i64: 1>, scalar_prefetch = 0 : i64, scratch_operands = 0 : i64, tpu.core_type = #tpu.core_type<tc>, window_params = [{transform_indices = @transform_0, window_bounds = array<i64: 8, 1024>}, {transform_indices = @transform_1, window_bounds = array<i64: 8, 64>}, {pipeline_mode = #tpu.pipeline_mode<synchronous>, transform_indices = @transform_2, window_bounds = array<i64: 1024, 256>}, {pipeline_mode = #tpu.pipeline_mode<synchronous>, transform_indices = @transform_3, window_bounds = array<i64: 1, 256>}, {pipeline_mode = #tpu.pipeline_mode<synchronous>, transform_indices = @transform_4, window_bounds = array<i64: 256, 128>}, {pipeline_mode = #tpu.pipeline_mode<synchronous>, transform_indices = @transform_5, window_bounds = array<i64: 1, 128>}, {pipeline_mode = #tpu.pipeline_mode<synchronous>, transform_indices = @transform_6, window_bounds = array<i64: 64, 256>}, {pipeline_mode = #tpu.pipeline_mode<synchronous>, transform_indices = @transform_7, window_bounds = array<i64: 1, 256>}, {pipeline_mode = #tpu.pipeline_mode<synchronous>, transform_indices = @transform_8, window_bounds = array<i64: 256, 1024>}, {pipeline_mode = #tpu.pipeline_mode<synchronous>, transform_indices = @transform_9, window_bounds = array<i64: 1, 1024>}, {transform_indices = @transform_10, window_bounds = array<i64: 8, 128>}, {transform_indices = @transform_11, window_bounds = array<i64: 8, 1024>}]} {
    %c0 = arith.constant 0 : index
    %c0_0 = arith.constant 0 : index
    %0 = vector.load %arg1[%c0, %c0_0] : memref<8x1024xf32, #tpu.memory_space<vmem>>, vector<8x1024xf32>
    %1 = arith.truncf %0 : vector<8x1024xf32> to vector<8x1024xbf16>
    %c0_1 = arith.constant 0 : index
    %c0_2 = arith.constant 0 : index
    %2 = vector.load %arg3[%c0_1, %c0_2] : memref<1024x256xbf16, #tpu.memory_space<vmem>>, vector<1024x256xbf16>
    %cst = arith.constant dense<0.000000e+00> : vector<8x256xf32>
    %3 = tpu.matmul %1, %2, %cst {dimension_numbers = #tpu.dot_dimension_numbers<[1], [0], [0], [1], [0, 0, 1, 1], [], []>} : vector<8x1024xbf16>, vector<1024x256xbf16>, vector<8x256xf32> -> vector<8x256xf32>
    %c0_3 = arith.constant 0 : index
    %c0_4 = arith.constant 0 : index
    %4 = vector.load %arg4[%c0_3, %c0_4] : memref<1x256xf32, #tpu.memory_space<vmem>>, vector<1x256xf32>
    %5 = vector.broadcast %4 : vector<1x256xf32> to vector<8x256xf32>
    %6 = arith.addf %3, %5 : vector<8x256xf32>
    %cst_5 = arith.constant 0.000000e+00 : f32
    %7 = vector.broadcast %cst_5 : f32 to vector<8x256xf32>
    %8 = arith.maximumf %6, %7 : vector<8x256xf32>
    %9 = arith.truncf %8 : vector<8x256xf32> to vector<8x256xbf16>
    %c0_6 = arith.constant 0 : index
    %c0_7 = arith.constant 0 : index
    %10 = vector.load %arg5[%c0_6, %c0_7] : memref<256x128xbf16, #tpu.memory_space<vmem>>, vector<256x128xbf16>
    %cst_8 = arith.constant dense<0.000000e+00> : vector<8x128xf32>
    %11 = tpu.matmul %9, %10, %cst_8 {dimension_numbers = #tpu.dot_dimension_numbers<[1], [0], [0], [1], [0, 0, 1, 1], [], []>} : vector<8x256xbf16>, vector<256x128xbf16>, vector<8x128xf32> -> vector<8x128xf32>
    %c0_9 = arith.constant 0 : index
    %c0_10 = arith.constant 0 : index
    %12 = vector.load %arg6[%c0_9, %c0_10] : memref<1x128xf32, #tpu.memory_space<vmem>>, vector<1x128xf32>
    %13 = vector.broadcast %12 : vector<1x128xf32> to vector<8x128xf32>
    %14 = arith.addf %11, %13 : vector<8x128xf32>
    %15 = vector.extract_strided_slice %14 {offsets = [0, 0], sizes = [8, 64], strides = [1, 1]} : vector<8x128xf32> to vector<8x64xf32>
    %16 = vector.extract_strided_slice %14 {offsets = [0, 64], sizes = [8, 64], strides = [1, 1]} : vector<8x128xf32> to vector<8x64xf32>
    %cst_11 = arith.constant 5.000000e-01 : f32
    %17 = vector.broadcast %cst_11 : f32 to vector<8x64xf32>
    %18 = arith.mulf %16, %17 : vector<8x64xf32>
    %19 = math.exp %18 : vector<8x64xf32>
    %c0_12 = arith.constant 0 : index
    %c0_13 = arith.constant 0 : index
    %20 = vector.load %arg2[%c0_12, %c0_13] : memref<8x64xf32, #tpu.memory_space<vmem>>, vector<8x64xf32>
    %21 = arith.mulf %19, %20 : vector<8x64xf32>
    %22 = arith.addf %15, %21 : vector<8x64xf32>
    %23 = arith.truncf %22 : vector<8x64xf32> to vector<8x64xbf16>
    %c0_14 = arith.constant 0 : index
    %c0_15 = arith.constant 0 : index
    %24 = vector.load %arg7[%c0_14, %c0_15] : memref<64x256xbf16, #tpu.memory_space<vmem>>, vector<64x256xbf16>
    %cst_16 = arith.constant dense<0.000000e+00> : vector<8x256xf32>
    %25 = tpu.matmul %23, %24, %cst_16 {dimension_numbers = #tpu.dot_dimension_numbers<[1], [0], [0], [1], [0, 0, 1, 1], [], []>} : vector<8x64xbf16>, vector<64x256xbf16>, vector<8x256xf32> -> vector<8x256xf32>
    %c0_17 = arith.constant 0 : index
    %c0_18 = arith.constant 0 : index
    %26 = vector.load %arg8[%c0_17, %c0_18] : memref<1x256xf32, #tpu.memory_space<vmem>>, vector<1x256xf32>
    %27 = vector.broadcast %26 : vector<1x256xf32> to vector<8x256xf32>
    %28 = arith.addf %25, %27 : vector<8x256xf32>
    %cst_19 = arith.constant 0.000000e+00 : f32
    %29 = vector.broadcast %cst_19 : f32 to vector<8x256xf32>
    %30 = arith.maximumf %28, %29 : vector<8x256xf32>
    %31 = arith.truncf %30 : vector<8x256xf32> to vector<8x256xbf16>
    %c0_20 = arith.constant 0 : index
    %c0_21 = arith.constant 0 : index
    %32 = vector.load %arg9[%c0_20, %c0_21] : memref<256x1024xbf16, #tpu.memory_space<vmem>>, vector<256x1024xbf16>
    %cst_22 = arith.constant dense<0.000000e+00> : vector<8x1024xf32>
    %33 = tpu.matmul %31, %32, %cst_22 {dimension_numbers = #tpu.dot_dimension_numbers<[1], [0], [0], [1], [0, 0, 1, 1], [], []>} : vector<8x256xbf16>, vector<256x1024xbf16>, vector<8x1024xf32> -> vector<8x1024xf32>
    %c0_23 = arith.constant 0 : index
    %c0_24 = arith.constant 0 : index
    %34 = vector.load %arg10[%c0_23, %c0_24] : memref<1x1024xf32, #tpu.memory_space<vmem>>, vector<1x1024xf32>
    %35 = vector.broadcast %34 : vector<1x1024xf32> to vector<8x1024xf32>
    %36 = arith.addf %33, %35 : vector<8x1024xf32>
    %cst_25 = arith.constant 0.000000e+00 : f32
    %37 = vector.broadcast %cst_25 : f32 to vector<8x1024xf32>
    %38 = arith.subf %37, %36 : vector<8x1024xf32>
    %39 = math.exp %38 : vector<8x1024xf32>
    %cst_26 = arith.constant 1.000000e+00 : f32
    %40 = vector.broadcast %cst_26 : f32 to vector<8x1024xf32>
    %41 = arith.addf %40, %39 : vector<8x1024xf32>
    %42 = tpu.reciprocal %41 {approx = true} : vector<8x1024xf32> -> vector<8x1024xf32>
    %c0_27 = arith.constant 0 : index
    %c0_28 = arith.constant 0 : index
    %43 = vector.load %arg11[%c0_27, %c0_28] : memref<8x128xf32, #tpu.memory_space<vmem>>, vector<8x128xf32>
    tpu.vector_store %arg11[%c0_27, %c0_28], %14 {strides = array<i32>} : memref<8x128xf32, #tpu.memory_space<vmem>>, vector<8x128xf32>,
    %c0_29 = arith.constant 0 : index
    %c0_30 = arith.constant 0 : index
    %44 = vector.load %arg12[%c0_29, %c0_30] : memref<8x1024xf32, #tpu.memory_space<vmem>>, vector<8x1024xf32>
    tpu.vector_store %arg12[%c0_29, %c0_30], %42 {strides = array<i32>} : memref<8x1024xf32, #tpu.memory_space<vmem>>, vector<8x1024xf32>,
    return
  }
  func.func @transform_0(%arg0: i32) -> (i32, i32) {
    %c0_i32 = arith.constant 0 : i32
    %c0_i32_0 = arith.constant 0 : i32
    return %arg0, %c0_i32 : i32, i32
  }
  func.func @transform_1(%arg0: i32) -> (i32, i32) {
    %c0_i32 = arith.constant 0 : i32
    %c0_i32_0 = arith.constant 0 : i32
    return %arg0, %c0_i32 : i32, i32
  }
  func.func @transform_2(%arg0: i32) -> (i32, i32) {
    %c0_i32 = arith.constant 0 : i32
    %c0_i32_0 = arith.constant 0 : i32
    %c0_i32_1 = arith.constant 0 : i32
    return %c0_i32, %c0_i32_0 : i32, i32
  }
  func.func @transform_3(%arg0: i32) -> (i32, i32) {
    %c0_i32 = arith.constant 0 : i32
    %c0_i32_0 = arith.constant 0 : i32
    %c0_i32_1 = arith.constant 0 : i32
    return %c0_i32, %c0_i32_0 : i32, i32
  }
  func.func @transform_4(%arg0: i32) -> (i32, i32) {
    %c0_i32 = arith.constant 0 : i32
    %c0_i32_0 = arith.constant 0 : i32
    %c0_i32_1 = arith.constant 0 : i32
    return %c0_i32, %c0_i32_0 : i32, i32
  }
  func.func @transform_5(%arg0: i32) -> (i32, i32) {
    %c0_i32 = arith.constant 0 : i32
    %c0_i32_0 = arith.constant 0 : i32
    %c0_i32_1 = arith.constant 0 : i32
    return %c0_i32, %c0_i32_0 : i32, i32
  }
  func.func @transform_6(%arg0: i32) -> (i32, i32) {
    %c0_i32 = arith.constant 0 : i32
    %c0_i32_0 = arith.constant 0 : i32
    %c0_i32_1 = arith.constant 0 : i32
    return %c0_i32, %c0_i32_0 : i32, i32
  }
  func.func @transform_7(%arg0: i32) -> (i32, i32) {
    %c0_i32 = arith.constant 0 : i32
    %c0_i32_0 = arith.constant 0 : i32
    %c0_i32_1 = arith.constant 0 : i32
    return %c0_i32, %c0_i32_0 : i32, i32
  }
  func.func @transform_8(%arg0: i32) -> (i32, i32) {
    %c0_i32 = arith.constant 0 : i32
    %c0_i32_0 = arith.constant 0 : i32
    %c0_i32_1 = arith.constant 0 : i32
    return %c0_i32, %c0_i32_0 : i32, i32
  }
  func.func @transform_9(%arg0: i32) -> (i32, i32) {
    %c0_i32 = arith.constant 0 : i32
    %c0_i32_0 = arith.constant 0 : i32
    %c0_i32_1 = arith.constant 0 : i32
    return %c0_i32, %c0_i32_0 : i32, i32
  }
  func.func @transform_10(%arg0: i32) -> (i32, i32) {
    %c0_i32 = arith.constant 0 : i32
    %c0_i32_0 = arith.constant 0 : i32
    return %arg0, %c0_i32 : i32, i32
  }
  func.func @transform_11(%arg0: i32) -> (i32, i32) {
    %c0_i32 = arith.constant 0 : i32
    %c0_i32_0 = arith.constant 0 : i32
    return %arg0, %c0_i32 : i32, i32
  }
}

</mosaic_0001>

<llo_original>
// kernel: vae_forward.1
$region0: #{vae_forward.1}
  #allocation0 [shape = 'u32[]', space=smem, size = 0x4, offset = 0x4, fixed_abs, tag = 'smem constant byte address 0x4 - core index']
  #allocation1 [shape = 'u32[144,128]{1,0:T(1,128)}', space=vmem, size = 0x12000, scoped, tag = 'internal scratch']
  %s0 = inlined_call_operand.vmem [shape: f32[8,1024], index: 0, kind: input, shape index: {}]
  %s1 = inlined_call_operand.vmem [shape: f32[8,64], index: 1, kind: input, shape index: {}]
  %s2 = inlined_call_operand.hbm [shape: bf16[1024,256], index: 2, kind: input, shape index: {}]
  %s3 = inlined_call_operand.vmem [shape: f32[1,256], index: 3, kind: input, shape index: {}]
  %s4 = inlined_call_operand.vmem [shape: bf16[256,128], index: 4, kind: input, shape index: {}]
  %s5 = inlined_call_operand.vmem [shape: f32[1,128], index: 5, kind: input, shape index: {}]
  %s6 = inlined_call_operand.vmem [shape: bf16[64,256], index: 6, kind: input, shape index: {}]
  %s7 = inlined_call_operand.vmem [shape: f32[1,256], index: 7, kind: input, shape index: {}]
  %s8 = inlined_call_operand.hbm [shape: bf16[256,1024], index: 8, kind: input, shape index: {}]
  %s9 = inlined_call_operand.vmem [shape: f32[1,1024], index: 9, kind: input, shape index: {}]
  %s10 = inlined_call_operand.vmem [shape: f32[8,128], index: 10, kind: output, shape index: {0}]
  %s11 = inlined_call_operand.vmem [shape: f32[8,1024], index: 11, kind: output, shape index: {1}]
  %12 = xla_tuple %s10, %s11
  %s13 = sld [smem:[#allocation0]]
  $region66: #{vae_forward.1} parent=0
    _
  %s15 = ssub.s32 1, %s13
  %s16 = scalar_select 0, %s15, %s13
  $region1: #{vae_forward.1} parent=0
    #allocation2 [shape = 'u8[524288]{0}', space=vmem, size = 0x80000, scoped, tag = 'input window, operand 2, single buffered']
    #allocation3 [shape = 's32[1]{0}', space=sflag, size = 0x4, scoped, tag = 'scoped memory for vae_forward.1']
    #allocation4 [shape = 'u8[524288]{0}', space=vmem, size = 0x80000, scoped, tag = 'input window, operand 8, single buffered']
    #allocation5 [shape = 's32[1]{0}', space=sflag, size = 0x4, scoped, tag = 'scoped memory for vae_forward.1']
    %17 = vsyncpa [#allocation3], 0
    %18 = vsyncpa [#allocation5], 0
    // Predicated region
    $region2: #{vae_forward.1} parent=1 // pred_check
      _
    $region3: #{vae_forward.1} parent=1 // pred_check_branch
      %20 = sbr.rel (0) target = $region5
    $region4: #{vae_forward.1} parent=1 // pred_region
      _
    $region5: #{vae_forward.1} parent=1 // pred_fallthru
      _
    // Predicated region
    $region6: #{vae_forward.1} parent=1 // pred_check
      _
    $region7: #{vae_forward.1} parent=1 // pred_check_branch
      %22 = sbr.rel (0) target = $region9
    $region8: #{vae_forward.1} parent=1 // pred_region
      _
    $region9: #{vae_forward.1} parent=1 // pred_fallthru
      _
    // Predicated region
    $region10: #{vae_forward.1} parent=1 // pred_check
      _
    $region11: #{vae_forward.1} parent=1 // pred_check_branch
      %24 = sbr.rel (0) target = $region13
    $region12: #{vae_forward.1} parent=1 // pred_region
      %s26 = ssub.s32 16384, 16384
      %27 = vsyncadd [#allocation3], %s26
      %s28 = sshll.u32 [#allocation2], 4
      %s29 = int_to_ptr.vmem [resolvable:$true] %s28
      %34 = dma.hbm_to_vmem [thread:$0]  %s2, 16384, %s29, [#allocation3], 128, 128, 8
    $region13: #{vae_forward.1} parent=1 // pred_fallthru
      _
    // Predicated region
    $region14: #{vae_forward.1} parent=1 // pred_check
      _
    $region15: #{vae_forward.1} parent=1 // pred_check_branch
      %36 = sbr.rel (0) target = $region17
    $region16: #{vae_forward.1} parent=1 // pred_region
      _
    $region17: #{vae_forward.1} parent=1 // pred_fallthru
      _
    // Predicated region
    $region18: #{vae_forward.1} parent=1 // pred_check
      _
    $region19: #{vae_forward.1} parent=1 // pred_check_branch
      %38 = sbr.rel (0) target = $region21
    $region20: #{vae_forward.1} parent=1 // pred_region
      _
    $region21: #{vae_forward.1} parent=1 // pred_fallthru
      _
    // Predicated region
    $region22: #{vae_forward.1} parent=1 // pred_check
      _
    $region23: #{vae_forward.1} parent=1 // pred_check_branch
      %40 = sbr.rel (0) target = $region25
    $region24: #{vae_forward.1} parent=1 // pred_region
      _
    $region25: #{vae_forward.1} parent=1 // pred_fallthru
      _
    // Predicated region
    $region26: #{vae_forward.1} parent=1 // pred_check
      _
    $region27: #{vae_forward.1} parent=1 // pred_check_branch
      %42 = sbr.rel (0) target = $region29
    $region28: #{vae_forward.1} parent=1 // pred_region
      _
    $region29: #{vae_forward.1} parent=1 // pred_fallthru
      _
    // Predicated region
    $region30: #{vae_forward.1} parent=1 // pred_check
      _
    $region31: #{vae_forward.1} parent=1 // pred_check_branch
      %44 = sbr.rel (0) target = $region33
    $region32: #{vae_forward.1} parent=1 // pred_region
      _
    $region33: #{vae_forward.1} parent=1 // pred_fallthru
      _
    // Predicated region
    $region34: #{vae_forward.1} parent=1 // pred_check
      _
    $region35: #{vae_forward.1} parent=1 // pred_check_branch
      %46 = sbr.rel (0) target = $region37
    $region36: #{vae_forward.1} parent=1 // pred_region
      %s48 = ssub.s32 16384, 16384
      %49 = vsyncadd [#allocation5], %s48
      %s50 = sshll.u32 [#allocation4], 4
      %s51 = int_to_ptr.vmem [resolvable:$true] %s50
      %56 = dma.hbm_to_vmem [thread:$0]  %s8, 16384, %s51, [#allocation5], 512, 512, 32
    $region37: #{vae_forward.1} parent=1 // pred_fallthru
      _
    // Predicated region
    $region38: #{vae_forward.1} parent=1 // pred_check
      _
    $region39: #{vae_forward.1} parent=1 // pred_check_branch
      %58 = sbr.rel (0) target = $region41
    $region40: #{vae_forward.1} parent=1 // pred_region
      _
    $region41: #{vae_forward.1} parent=1 // pred_fallthru
      _
    // Predicated region
    $region42: #{vae_forward.1} parent=1 // pred_check
      _
    $region43: #{vae_forward.1} parent=1 // pred_check_branch
      %60 = sbr.rel (0) target = $region45
    $region44: #{vae_forward.1} parent=1 // pred_region
      %61 = dma.done [#allocation3], 16384
    $region45: #{vae_forward.1} parent=1 // pred_fallthru
      _
    // Predicated region
    $region46: #{vae_forward.1} parent=1 // pred_check
      _
    $region47: #{vae_forward.1} parent=1 // pred_check_branch
      %63 = sbr.rel (0) target = $region49
    $region48: #{vae_forward.1} parent=1 // pred_region
      %64 = dma.done [#allocation5], 16384
    $region49: #{vae_forward.1} parent=1 // pred_fallthru
      _
    %v66 = vld [vmem:[%s0] sm:$0xff]
    %v67 = vld [vmem:[%s0 + $0x8] sm:$0xff]
    %v68 = vld [vmem:[%s0 + $0x10] sm:$0xff]
    %v69 = vld [vmem:[%s0 + $0x18] sm:$0xff]
    %v70 = vld [vmem:[%s0 + $0x20] sm:$0xff]
    %v71 = vld [vmem:[%s0 + $0x28] sm:$0xff]
    %v72 = vld [vmem:[%s0 + $0x30] sm:$0xff]
    %v73 = vld [vmem:[%s0 + $0x38] sm:$0xff]
    %v74 = vpack.c.bf16 %v66, %v66
    %v75 = vpack.c.bf16 %v67, %v67
    %v76 = vpack.c.bf16 %v68, %v68
    %v77 = vpack.c.bf16 %v69, %v69
    %v78 = vpack.c.bf16 %v70, %v70
    %v79 = vpack.c.bf16 %v71, %v71
    %v80 = vpack.c.bf16 %v72, %v72
    %v81 = vpack.c.bf16 %v73, %v73
    %v82 = vld [vmem:[#allocation2] sm:$0xff]
    %v83 = vld [vmem:[#allocation2 + $0x8] sm:$0xff]
    %v84 = vld [vmem:[#allocation2 + $0x10] sm:$0xff]
    %v85 = vld [vmem:[#allocation2 + $0x18] sm:$0xff]
    %v86 = vld [vmem:[#allocation2 + $0x20] sm:$0xff]
    %v87 = vld [vmem:[#allocation2 + $0x28] sm:$0xff]
    %v88 = vld [vmem:[#allocation2 + $0x30] sm:$0xff]
    %v89 = vld [vmem:[#allocation2 + $0x38] sm:$0xff]
    %v90 = vld [vmem:[#allocation2 + $0x40] sm:$0xff]
    %v91 = vld [vmem:[#allocation2 + $0x48] sm:$0xff]
    %v92 = vld [vmem:[#allocation2 + $0x50] sm:$0xff]
    %v93 = vld [vmem:[#allocation2 + $0x58] sm:$0xff]
    %v94 = vld [vmem:[#allocation2 + $0x60] sm:$0xff]
    %v95 = vld [vmem:[#allocation2 + $0x68] sm:$0xff]
    %v96 = vld [vmem:[#allocation2 + $0x70] sm:$0xff]
    %v97 = vld [vmem:[#allocation2 + $0x78] sm:$0xff]
    %v98 = vld [vmem:[#allocation2 + $0x80] sm:$0xff]
    %v99 = vld [vmem:[#allocation2 + $0x88] sm:$0xff]
    %v100 = vld [vmem:[#allocation2 + $0x90] sm:$0xff]
    %v101 = vld [vmem:[#allocation2 + $0x98] sm:$0xff]
    %v102 = vld [vmem:[#allocation2 + $0xa0] sm:$0xff]
    %v103 = vld [vmem:[#allocation2 + $0xa8] sm:$0xff]
    %v104 = vld [vmem:[#allocation2 + $0xb0] sm:$0xff]
    %v105 = vld [vmem:[#allocation2 + $0xb8] sm:$0xff]
    %v106 = vld [vmem:[#allocation2 + $0xc0] sm:$0xff]
    %v107 = vld [vmem:[#allocation2 + $0xc8] sm:$0xff]
    %v108 = vld [vmem:[#allocation2 + $0xd0] sm:$0xff]
    %v109 = vld [vmem:[#allocation2 + $0xd8] sm:$0xff]
    %v110 = vld [vmem:[#allocation2 + $0xe0] sm:$0xff]
    %v111 = vld [vmem:[#allocation2 + $0xe8] sm:$0xff]
    %v112 = vld [vmem:[#allocation2 + $0xf0] sm:$0xff]
    %v113 = vld [vmem:[#allocation2 + $0xf8] sm:$0xff]
    %v114 = vld [vmem:[#allocation2 + $0x100] sm:$0xff]
    %v115 = vld [vmem:[#allocation2 + $0x108] sm:$0xff]
    %v116 = vld [vmem:[#allocation2 + $0x110] sm:$0xff]
    %v117 = vld [vmem:[#allocation2 + $0x118] sm:$0xff]
    %v118 = vld [vmem:[#allocation2 + $0x120] sm:$0xff]
    %v119 = vld [vmem:[#allocation2 + $0x128] sm:$0xff]
    %v120 = vld [vmem:[#allocation2 + $0x130] sm:$0xff]
    %v121 = vld [vmem:[#allocation2 + $0x138] sm:$0xff]
    %v122 = vld [vmem:[#allocation2 + $0x140] sm:$0xff]
    %v123 = vld [vmem:[#allocation2 + $0x148] sm:$0xff]
    %v124 = vld [vmem:[#allocation2 + $0x150] sm:$0xff]
    %v125 = vld [vmem:[#allocation2 + $0x158] sm:$0xff]
    %v126 = vld [vmem:[#allocation2 + $0x160] sm:$0xff]
    %v127 = vld [vmem:[#allocation2 + $0x168] sm:$0xff]
    %v128 = vld [vmem:[#allocation2 + $0x170] sm:$0xff]
    %v129 = vld [vmem:[#allocation2 + $0x178] sm:$0xff]
    %v130 = vld [vmem:[#allocation2 + $0x180] sm:$0xff]
    %v131 = vld [vmem:[#allocation2 + $0x188] sm:$0xff]
    %v132 = vld [vmem:[#allocation2 + $0x190] sm:$0xff]
    %v133 = vld [vmem:[#allocation2 + $0x198] sm:$0xff]
    %v134 = vld [vmem:[#allocation2 + $0x1a0] sm:$0xff]
    %v135 = vld [vmem:[#allocation2 + $0x1a8] sm:$0xff]
    %v136 = vld [vmem:[#allocation2 + $0x1b0] sm:$0xff]
    %v137 = vld [vmem:[#allocation2 + $0x1b8] sm:$0xff]
    %v138 = vld [vmem:[#allocation2 + $0x1c0] sm:$0xff]
    %v139 = vld [vmem:[#allocation2 + $0x1c8] sm:$0xff]
    %v140 = vld [vmem:[#allocation2 + $0x1d0] sm:$0xff]
    %v141 = vld [vmem:[#allocation2 + $0x1d8] sm:$0xff]
    %v142 = vld [vmem:[#allocation2 + $0x1e0] sm:$0xff]
    %v143 = vld [vmem:[#allocation2 + $0x1e8] sm:$0xff]
    %v144 = vld [vmem:[#allocation2 + $0x1f0] sm:$0xff]
    %v145 = vld [vmem:[#allocation2 + $0x1f8] sm:$0xff]
    %v146 = vld [vmem:[#allocation2 + $0x200] sm:$0xff]
    %v147 = vld [vmem:[#allocation2 + $0x208] sm:$0xff]
    %v148 = vld [vmem:[#allocation2 + $0x210] sm:$0xff]
    %v149 = vld [vmem:[#allocation2 + $0x218] sm:$0xff]
    %v150 = vld [vmem:[#allocation2 + $0x220] sm:$0xff]
    %v151 = vld [vmem:[#allocation2 + $0x228] sm:$0xff]
    %v152 = vld [vmem:[#allocation2 + $0x230] sm:$0xff]
    %v153 = vld [vmem:[#allocation2 + $0x238] sm:$0xff]
    %v154 = vld [vmem:[#allocation2 + $0x240] sm:$0xff]
    %v155 = vld [vmem:[#allocation2 + $0x248] sm:$0xff]
    %v156 = vld [vmem:[#allocation2 + $0x250] sm:$0xff]
    %v157 = vld [vmem:[#allocation2 + $0x258] sm:$0xff]
    %v158 = vld [vmem:[#allocation2 + $0x260] sm:$0xff]
    %v159 = vld [vmem:[#allocation2 + $0x268] sm:$0xff]
    %v160 = vld [vmem:[#allocation2 + $0x270] sm:$0xff]
    %v161 = vld [vmem:[#allocation2 + $0x278] sm:$0xff]
    %v162 = vld [vmem:[#allocation2 + $0x280] sm:$0xff]
    %v163 = vld [vmem:[#allocation2 + $0x288] sm:$0xff]
    %v164 = vld [vmem:[#allocation2 + $0x290] sm:$0xff]
    %v165 = vld [vmem:[#allocation2 + $0x298] sm:$0xff]
    %v166 = vld [vmem:[#allocation2 + $0x2a0] sm:$0xff]
    %v167 = vld [vmem:[#allocation2 + $0x2a8] sm:$0xff]
    %v168 = vld [vmem:[#allocation2 + $0x2b0] sm:$0xff]
    %v169 = vld [vmem:[#allocation2 + $0x2b8] sm:$0xff]
    %v170 = vld [vmem:[#allocation2 + $0x2c0] sm:$0xff]
    %v171 = vld [vmem:[#allocation2 + $0x2c8] sm:$0xff]
    %v172 = vld [vmem:[#allocation2 + $0x2d0] sm:$0xff]
    %v173 = vld [vmem:[#allocation2 + $0x2d8] sm:$0xff]
    %v174 = vld [vmem:[#allocation2 + $0x2e0] sm:$0xff]
    %v175 = vld [vmem:[#allocation2 + $0x2e8] sm:$0xff]
    %v176 = vld [vmem:[#allocation2 + $0x2f0] sm:$0xff]
    %v177 = vld [vmem:[#allocation2 + $0x2f8] sm:$0xff]
    %v178 = vld [vmem:[#allocation2 + $0x300] sm:$0xff]
    %v179 = vld [vmem:[#allocation2 + $0x308] sm:$0xff]
    %v180 = vld [vmem:[#allocation2 + $0x310] sm:$0xff]
    %v181 = vld [vmem:[#allocation2 + $0x318] sm:$0xff]
    %v182 = vld [vmem:[#allocation2 + $0x320] sm:$0xff]
    %v183 = vld [vmem:[#allocation2 + $0x328] sm:$0xff]
    %v184 = vld [vmem:[#allocation2 + $0x330] sm:$0xff]
    %v185 = vld [vmem:[#allocation2 + $0x338] sm:$0xff]
    %v186 = vld [vmem:[#allocation2 + $0x340] sm:$0xff]
    %v187 = vld [vmem:[#allocation2 + $0x348] sm:$0xff]
    %v188 = vld [vmem:[#allocation2 + $0x350] sm:$0xff]
    %v189 = vld [vmem:[#allocation2 + $0x358] sm:$0xff]
    %v190 = vld [vmem:[#allocation2 + $0x360] sm:$0xff]
    %v191 = vld [vmem:[#allocation2 + $0x368] sm:$0xff]
    %v192 = vld [vmem:[#allocation2 + $0x370] sm:$0xff]
    %v193 = vld [vmem:[#allocation2 + $0x378] sm:$0xff]
    %v194 = vld [vmem:[#allocation2 + $0x380] sm:$0xff]
    %v195 = vld [vmem:[#allocation2 + $0x388] sm:$0xff]
    %v196 = vld [vmem:[#allocation2 + $0x390] sm:$0xff]
    %v197 = vld [vmem:[#allocation2 + $0x398] sm:$0xff]
    %v198 = vld [vmem:[#allocation2 + $0x3a0] sm:$0xff]
    %v199 = vld [vmem:[#allocation2 + $0x3a8] sm:$0xff]
    %v200 = vld [vmem:[#allocation2 + $0x3b0] sm:$0xff]
    %v201 = vld [vmem:[#allocation2 + $0x3b8] sm:$0xff]
    %v202 = vld [vmem:[#allocation2 + $0x3c0] sm:$0xff]
    %v203 = vld [vmem:[#allocation2 + $0x3c8] sm:$0xff]
    %v204 = vld [vmem:[#allocation2 + $0x3d0] sm:$0xff]
    %v205 = vld [vmem:[#allocation2 + $0x3d8] sm:$0xff]
    %v206 = vld [vmem:[#allocation2 + $0x3e0] sm:$0xff]
    %v207 = vld [vmem:[#allocation2 + $0x3e8] sm:$0xff]
    %v208 = vld [vmem:[#allocation2 + $0x3f0] sm:$0xff]
    %v209 = vld [vmem:[#allocation2 + $0x3f8] sm:$0xff]
    %v210 = vld [vmem:[%s3] sm:$0x3]
    %v212 = vlaneseq
    %v213 = vshrl.u32 %v212, 7
    %v214 = vsub.s32 0, %v213
    %v215 = vrot.slane %v210, %v214
    %v216 = vlaneseq
    %v217 = vshrl.u32 %v216, 7
    %v218 = vsub.s32 1, %v217
    %v219 = vrot.slane %v210, %v218
    %v350 = vunpack.c.l.b16 %v82
    %v351 = vunpack.c.h.b16 %v82
    %v352 = vunpack.c.l.b16 %v83
    %v353 = vunpack.c.h.b16 %v83
    %v354 = vunpack.c.l.b16 %v84
    %v355 = vunpack.c.h.b16 %v84
    %v356 = vunpack.c.l.b16 %v85
    %v357 = vunpack.c.h.b16 %v85
    %v358 = vunpack.c.l.b16 %v86
    %v359 = vunpack.c.h.b16 %v86
    %v360 = vunpack.c.l.b16 %v87
    %v361 = vunpack.c.h.b16 %v87
    %v362 = vunpack.c.l.b16 %v88
    %v363 = vunpack.c.h.b16 %v88
    %v364 = vunpack.c.l.b16 %v89
    %v365 = vunpack.c.h.b16 %v89
    %v366 = vunpack.c.l.b16 %v90
    %v367 = vunpack.c.h.b16 %v90
    %v368 = vunpack.c.l.b16 %v91
    %v369 = vunpack.c.h.b16 %v91
    %v370 = vunpack.c.l.b16 %v92
    %v371 = vunpack.c.h.b16 %v92
    %v372 = vunpack.c.l.b16 %v93
    %v373 = vunpack.c.h.b16 %v93
    %v374 = vunpack.c.l.b16 %v94
    %v375 = vunpack.c.h.b16 %v94
    %v376 = vunpack.c.l.b16 %v95
    %v377 = vunpack.c.h.b16 %v95
    %v378 = vunpack.c.l.b16 %v96
    %v379 = vunpack.c.h.b16 %v96
    %v380 = vunpack.c.l.b16 %v97
    %v381 = vunpack.c.h.b16 %v97
    %v382 = vunpack.c.l.b16 %v98
    %v383 = vunpack.c.h.b16 %v98
    %v384 = vunpack.c.l.b16 %v99
    %v385 = vunpack.c.h.b16 %v99
    %v386 = vunpack.c.l.b16 %v100
    %v387 = vunpack.c.h.b16 %v100
    %v388 = vunpack.c.l.b16 %v101
    %v389 = vunpack.c.h.b16 %v101
    %v390 = vunpack.c.l.b16 %v102
    %v391 = vunpack.c.h.b16 %v102
    %v392 = vunpack.c.l.b16 %v103
    %v393 = vunpack.c.h.b16 %v103
    %v394 = vunpack.c.l.b16 %v104
    %v395 = vunpack.c.h.b16 %v104
    %v396 = vunpack.c.l.b16 %v105
    %v397 = vunpack.c.h.b16 %v105
    %v398 = vunpack.c.l.b16 %v106
    %v399 = vunpack.c.h.b16 %v106
    %v400 = vunpack.c.l.b16 %v107
    %v401 = vunpack.c.h.b16 %v107
    %v402 = vunpack.c.l.b16 %v108
    %v403 = vunpack.c.h.b16 %v108
    %v404 = vunpack.c.l.b16 %v109
    %v405 = vunpack.c.h.b16 %v109
    %v406 = vunpack.c.l.b16 %v110
    %v407 = vunpack.c.h.b16 %v110
    %v408 = vunpack.c.l.b16 %v111
    %v409 = vunpack.c.h.b16 %v111
    %v410 = vunpack.c.l.b16 %v112
    %v411 = vunpack.c.h.b16 %v112
    %v412 = vunpack.c.l.b16 %v113
    %v413 = vunpack.c.h.b16 %v113
    %v414 = vunpack.c.l.b16 %v114
    %v415 = vunpack.c.h.b16 %v114
    %v416 = vunpack.c.l.b16 %v115
    %v417 = vunpack.c.h.b16 %v115
    %v418 = vunpack.c.l.b16 %v116
    %v419 = vunpack.c.h.b16 %v116
    %v420 = vunpack.c.l.b16 %v117
    %v421 = vunpack.c.h.b16 %v117
    %v422 = vunpack.c.l.b16 %v118
    %v423 = vunpack.c.h.b16 %v118
    %v424 = vunpack.c.l.b16 %v119
    %v425 = vunpack.c.h.b16 %v119
    %v426 = vunpack.c.l.b16 %v120
    %v427 = vunpack.c.h.b16 %v120
    %v428 = vunpack.c.l.b16 %v121
    %v429 = vunpack.c.h.b16 %v121
    %v430 = vunpack.c.l.b16 %v122
    %v431 = vunpack.c.h.b16 %v122
    %v432 = vunpack.c.l.b16 %v123
    %v433 = vunpack.c.h.b16 %v123
    %v434 = vunpack.c.l.b16 %v124
    %v435 = vunpack.c.h.b16 %v124
    %v436 = vunpack.c.l.b16 %v125
    %v437 = vunpack.c.h.b16 %v125
    %v438 = vunpack.c.l.b16 %v126
    %v439 = vunpack.c.h.b16 %v126
    %v440 = vunpack.c.l.b16 %v127
    %v441 = vunpack.c.h.b16 %v127
    %v442 = vunpack.c.l.b16 %v128
    %v443 = vunpack.c.h.b16 %v128
    %v444 = vunpack.c.l.b16 %v129
    %v445 = vunpack.c.h.b16 %v129
    %v446 = vunpack.c.l.b16 %v130
    %v447 = vunpack.c.h.b16 %v130
    %v448 = vunpack.c.l.b16 %v131
    %v449 = vunpack.c.h.b16 %v131
    %v450 = vunpack.c.l.b16 %v132
    %v451 = vunpack.c.h.b16 %v132
    %v452 = vunpack.c.l.b16 %v133
    %v453 = vunpack.c.h.b16 %v133
    %v454 = vunpack.c.l.b16 %v134
    %v455 = vunpack.c.h.b16 %v134
    %v456 = vunpack.c.l.b16 %v135
    %v457 = vunpack.c.h.b16 %v135
    %v458 = vunpack.c.l.b16 %v136
    %v459 = vunpack.c.h.b16 %v136
    %v460 = vunpack.c.l.b16 %v137
    %v461 = vunpack.c.h.b16 %v137
    %v462 = vunpack.c.l.b16 %v138
    %v463 = vunpack.c.h.b16 %v138
    %v464 = vunpack.c.l.b16 %v139
    %v465 = vunpack.c.h.b16 %v139
    %v466 = vunpack.c.l.b16 %v140
    %v467 = vunpack.c.h.b16 %v140
    %v468 = vunpack.c.l.b16 %v141
    %v469 = vunpack.c.h.b16 %v141
    %v470 = vunpack.c.l.b16 %v142
    %v471 = vunpack.c.h.b16 %v142
    %v472 = vunpack.c.l.b16 %v143
    %v473 = vunpack.c.h.b16 %v143
    %v474 = vunpack.c.l.b16 %v144
    %v475 = vunpack.c.h.b16 %v144
    %v476 = vunpack.c.l.b16 %v145
    %v477 = vunpack.c.h.b16 %v145
    %v478 = vunpack.c.l.b16 %v146
    %v479 = vunpack.c.h.b16 %v146
    %v480 = vunpack.c.l.b16 %v147
    %v481 = vunpack.c.h.b16 %v147
    %v482 = vunpack.c.l.b16 %v148
    %v483 = vunpack.c.h.b16 %v148
    %v484 = vunpack.c.l.b16 %v149
    %v485 = vunpack.c.h.b16 %v149
    %v486 = vunpack.c.l.b16 %v150
    %v487 = vunpack.c.h.b16 %v150
    %v488 = vunpack.c.l.b16 %v151
    %v489 = vunpack.c.h.b16 %v151
    %v490 = vunpack.c.l.b16 %v152
    %v491 = vunpack.c.h.b16 %v152
    %v492 = vunpack.c.l.b16 %v153
    %v493 = vunpack.c.h.b16 %v153
    %v494 = vunpack.c.l.b16 %v154
    %v495 = vunpack.c.h.b16 %v154
    %v496 = vunpack.c.l.b16 %v155
    %v497 = vunpack.c.h.b16 %v155
    %v498 = vunpack.c.l.b16 %v156
    %v499 = vunpack.c.h.b16 %v156
    %v500 = vunpack.c.l.b16 %v157
    %v501 = vunpack.c.h.b16 %v157
    %v502 = vunpack.c.l.b16 %v158
    %v503 = vunpack.c.h.b16 %v158
    %v504 = vunpack.c.l.b16 %v159
    %v505 = vunpack.c.h.b16 %v159
    %v506 = vunpack.c.l.b16 %v160
    %v507 = vunpack.c.h.b16 %v160
    %v508 = vunpack.c.l.b16 %v161
    %v509 = vunpack.c.h.b16 %v161
    %v510 = vunpack.c.l.b16 %v162
    %v511 = vunpack.c.h.b16 %v162
    %v512 = vunpack.c.l.b16 %v163
    %v513 = vunpack.c.h.b16 %v163
    %v514 = vunpack.c.l.b16 %v164
    %v515 = vunpack.c.h.b16 %v164
    %v516 = vunpack.c.l.b16 %v165
    %v517 = vunpack.c.h.b16 %v165
    %v518 = vunpack.c.l.b16 %v166
    %v519 = vunpack.c.h.b16 %v166
    %v520 = vunpack.c.l.b16 %v167
    %v521 = vunpack.c.h.b16 %v167
    %v522 = vunpack.c.l.b16 %v168
    %v523 = vunpack.c.h.b16 %v168
    %v524 = vunpack.c.l.b16 %v169
    %v525 = vunpack.c.h.b16 %v169
    %v526 = vunpack.c.l.b16 %v170
    %v527 = vunpack.c.h.b16 %v170
    %v528 = vunpack.c.l.b16 %v171
    %v529 = vunpack.c.h.b16 %v171
    %v530 = vunpack.c.l.b16 %v172
    %v531 = vunpack.c.h.b16 %v172
    %v532 = vunpack.c.l.b16 %v173
    %v533 = vunpack.c.h.b16 %v173
    %v534 = vunpack.c.l.b16 %v174
    %v535 = vunpack.c.h.b16 %v174
    %v536 = vunpack.c.l.b16 %v175
    %v537 = vunpack.c.h.b16 %v175
    %v538 = vunpack.c.l.b16 %v176
    %v539 = vunpack.c.h.b16 %v176
    %v540 = vunpack.c.l.b16 %v177
    %v541 = vunpack.c.h.b16 %v177
    %v542 = vunpack.c.l.b16 %v178
    %v543 = vunpack.c.h.b16 %v178
    %v544 = vunpack.c.l.b16 %v179
    %v545 = vunpack.c.h.b16 %v179
    %v546 = vunpack.c.l.b16 %v180
    %v547 = vunpack.c.h.b16 %v180
    %v548 = vunpack.c.l.b16 %v181
    %v549 = vunpack.c.h.b16 %v181
    %v550 = vunpack.c.l.b16 %v182
    %v551 = vunpack.c.h.b16 %v182
    %v552 = vunpack.c.l.b16 %v183
    %v553 = vunpack.c.h.b16 %v183
    %v554 = vunpack.c.l.b16 %v184
    %v555 = vunpack.c.h.b16 %v184
    %v556 = vunpack.c.l.b16 %v185
    %v557 = vunpack.c.h.b16 %v185
    %v558 = vunpack.c.l.b16 %v186
    %v559 = vunpack.c.h.b16 %v186
    %v560 = vunpack.c.l.b16 %v187
    %v561 = vunpack.c.h.b16 %v187
    %v562 = vunpack.c.l.b16 %v188
    %v563 = vunpack.c.h.b16 %v188
    %v564 = vunpack.c.l.b16 %v189
    %v565 = vunpack.c.h.b16 %v189
    %v566 = vunpack.c.l.b16 %v190
    %v567 = vunpack.c.h.b16 %v190
    %v568 = vunpack.c.l.b16 %v191
    %v569 = vunpack.c.h.b16 %v191
    %v570 = vunpack.c.l.b16 %v192
    %v571 = vunpack.c.h.b16 %v192
    %v572 = vunpack.c.l.b16 %v193
    %v573 = vunpack.c.h.b16 %v193
    %v574 = vunpack.c.l.b16 %v194
    %v575 = vunpack.c.h.b16 %v194
    %v576 = vunpack.c.l.b16 %v195
    %v577 = vunpack.c.h.b16 %v195
    %v578 = vunpack.c.l.b16 %v196
    %v579 = vunpack.c.h.b16 %v196
    %v580 = vunpack.c.l.b16 %v197
    %v581 = vunpack.c.h.b16 %v197
    %v582 = vunpack.c.l.b16 %v198
    %v583 = vunpack.c.h.b16 %v198
    %v584 = vunpack.c.l.b16 %v199
    %v585 = vunpack.c.h.b16 %v199
    %v586 = vunpack.c.l.b16 %v200
    %v587 = vunpack.c.h.b16 %v200
    %v588 = vunpack.c.l.b16 %v201
    %v589 = vunpack.c.h.b16 %v201
    %v590 = vunpack.c.l.b16 %v202
    %v591 = vunpack.c.h.b16 %v202
    %v592 = vunpack.c.l.b16 %v203
    %v593 = vunpack.c.h.b16 %v203
    %v594 = vunpack.c.l.b16 %v204
    %v595 = vunpack.c.h.b16 %v204
    %v596 = vunpack.c.l.b16 %v205
    %v597 = vunpack.c.h.b16 %v205
    %v598 = vunpack.c.l.b16 %v206
    %v599 = vunpack.c.h.b16 %v206
    %v600 = vunpack.c.l.b16 %v207
    %v601 = vunpack.c.h.b16 %v207
    %v602 = vunpack.c.l.b16 %v208
    %v603 = vunpack.c.h.b16 %v208
    %v604 = vunpack.c.l.b16 %v209
    %v605 = vunpack.c.h.b16 %v209
    %v606 = vpack.c.b16 %v352, %v350
    %v607 = vpack.c.b16 %v353, %v351
    %v608 = vpack.c.b16 %v356, %v354
    %v609 = vpack.c.b16 %v357, %v355
    %v610 = vpack.c.b16 %v360, %v358
    %v611 = vpack.c.b16 %v361, %v359
    %v612 = vpack.c.b16 %v364, %v362
    %v613 = vpack.c.b16 %v365, %v363
    %v614 = vpack.c.b16 %v368, %v366
    %v615 = vpack.c.b16 %v369, %v367
    %v616 = vpack.c.b16 %v372, %v370
    %v617 = vpack.c.b16 %v373, %v371
    %v618 = vpack.c.b16 %v376, %v374
    %v619 = vpack.c.b16 %v377, %v375
    %v620 = vpack.c.b16 %v380, %v378
    %v621 = vpack.c.b16 %v381, %v379
    %v622 = vpack.c.b16 %v384, %v382
    %v623 = vpack.c.b16 %v385, %v383
    %v624 = vpack.c.b16 %v388, %v386
    %v625 = vpack.c.b16 %v389, %v387
    %v626 = vpack.c.b16 %v392, %v390
    %v627 = vpack.c.b16 %v393, %v391
    %v628 = vpack.c.b16 %v396, %v394
    %v629 = vpack.c.b16 %v397, %v395
    %v630 = vpack.c.b16 %v400, %v398
    %v631 = vpack.c.b16 %v401, %v399
    %v632 = vpack.c.b16 %v404, %v402
    %v633 = vpack.c.b16 %v405, %v403
    %v634 = vpack.c.b16 %v408, %v406
    %v635 = vpack.c.b16 %v409, %v407
    %v636 = vpack.c.b16 %v412, %v410
    %v637 = vpack.c.b16 %v413, %v411
    %v638 = vpack.c.b16 %v416, %v414
    %v639 = vpack.c.b16 %v417, %v415
    %v640 = vpack.c.b16 %v420, %v418
    %v641 = vpack.c.b16 %v421, %v419
    %v642 = vpack.c.b16 %v424, %v422
    %v643 = vpack.c.b16 %v425, %v423
    %v644 = vpack.c.b16 %v428, %v426
    %v645 = vpack.c.b16 %v429, %v427
    %v646 = vpack.c.b16 %v432, %v430
    %v647 = vpack.c.b16 %v433, %v431
    %v648 = vpack.c.b16 %v436, %v434
    %v649 = vpack.c.b16 %v437, %v435
    %v650 = vpack.c.b16 %v440, %v438
    %v651 = vpack.c.b16 %v441, %v439
    %v652 = vpack.c.b16 %v444, %v442
    %v653 = vpack.c.b16 %v445, %v443
    %v654 = vpack.c.b16 %v448, %v446
    %v655 = vpack.c.b16 %v449, %v447
    %v656 = vpack.c.b16 %v452, %v450
    %v657 = vpack.c.b16 %v453, %v451
    %v658 = vpack.c.b16 %v456, %v454
    %v659 = vpack.c.b16 %v457, %v455
    %v660 = vpack.c.b16 %v460, %v458
    %v661 = vpack.c.b16 %v461, %v459
    %v662 = vpack.c.b16 %v464, %v462
    %v663 = vpack.c.b16 %v465, %v463
    %v664 = vpack.c.b16 %v468, %v466
    %v665 = vpack.c.b16 %v469, %v467
    %v666 = vpack.c.b16 %v472, %v470
    %v667 = vpack.c.b16 %v473, %v471
    %v668 = vpack.c.b16 %v476, %v474
    %v669 = vpack.c.b16 %v477, %v475
    %v670 = vpack.c.b16 %v480, %v478
    %v671 = vpack.c.b16 %v481, %v479
    %v672 = vpack.c.b16 %v484, %v482
    %v673 = vpack.c.b16 %v485, %v483
    %v674 = vpack.c.b16 %v488, %v486
    %v675 = vpack.c.b16 %v489, %v487
    %v676 = vpack.c.b16 %v492, %v490
    %v677 = vpack.c.b16 %v493, %v491
    %v678 = vpack.c.b16 %v496, %v494
    %v679 = vpack.c.b16 %v497, %v495
    %v680 = vpack.c.b16 %v500, %v498
    %v681 = vpack.c.b16 %v501, %v499
    %v682 = vpack.c.b16 %v504, %v502
    %v683 = vpack.c.b16 %v505, %v503
    %v684 = vpack.c.b16 %v508, %v506
    %v685 = vpack.c.b16 %v509, %v507
    %v686 = vpack.c.b16 %v512, %v510
    %v687 = vpack.c.b16 %v513, %v511
    %v688 = vpack.c.b16 %v516, %v514
    %v689 = vpack.c.b16 %v517, %v515
    %v690 = vpack.c.b16 %v520, %v518
    %v691 = vpack.c.b16 %v521, %v519
    %v692 = vpack.c.b16 %v524, %v522
    %v693 = vpack.c.b16 %v525, %v523
    %v694 = vpack.c.b16 %v528, %v526
    %v695 = vpack.c.b16 %v529, %v527
    %v696 = vpack.c.b16 %v532, %v530
    %v697 = vpack.c.b16 %v533, %v531
    %v698 = vpack.c.b16 %v536, %v534
    %v699 = vpack.c.b16 %v537, %v535
    %v700 = vpack.c.b16 %v540, %v538
    %v701 = vpack.c.b16 %v541, %v539
    %v702 = vpack.c.b16 %v544, %v542
    %v703 = vpack.c.b16 %v545, %v543
    %v704 = vpack.c.b16 %v548, %v546
    %v705 = vpack.c.b16 %v549, %v547
    %v706 = vpack.c.b16 %v552, %v550
    %v707 = vpack.c.b16 %v553, %v551
    %v708 = vpack.c.b16 %v556, %v554
    %v709 = vpack.c.b16 %v557, %v555
    %v710 = vpack.c.b16 %v560, %v558
    %v711 = vpack.c.b16 %v561, %v559
    %v712 = vpack.c.b16 %v564, %v562
    %v713 = vpack.c.b16 %v565, %v563
    %v714 = vpack.c.b16 %v568, %v566
    %v715 = vpack.c.b16 %v569, %v567
    %v716 = vpack.c.b16 %v572, %v570
    %v717 = vpack.c.b16 %v573, %v571
    %v718 = vpack.c.b16 %v576, %v574
    %v719 = vpack.c.b16 %v577, %v575
    %v720 = vpack.c.b16 %v580, %v578
    %v721 = vpack.c.b16 %v581, %v579
    %v722 = vpack.c.b16 %v584, %v582
    %v723 = vpack.c.b16 %v585, %v583
    %v724 = vpack.c.b16 %v588, %v586
    %v725 = vpack.c.b16 %v589, %v587
    %v726 = vpack.c.b16 %v592, %v590
    %v727 = vpack.c.b16 %v593, %v591
    %v728 = vpack.c.b16 %v596, %v594
    %v729 = vpack.c.b16 %v597, %v595
    %v730 = vpack.c.b16 %v600, %v598
    %v731 = vpack.c.b16 %v601, %v599
    %v732 = vpack.c.b16 %v604, %v602
    %v733 = vpack.c.b16 %v605, %v603
    %862 = vmatprep.subr.bf16.mxu0 %v621
    %863 = vmatpush1.bf16.msra.mxu0 %v620
    %864 = vmatprep.subr.bf16.mxu0 %v619
    %865 = vmatpush1.bf16.msra.mxu0 %v618
    %866 = vmatprep.subr.bf16.mxu0 %v617
    %867 = vmatpush1.bf16.msra.mxu0 %v616
    %868 = vmatprep.subr.bf16.mxu0 %v615
    %869 = vmatpush1.bf16.msra.mxu0 %v614
    %870 = vmatprep.subr.bf16.mxu0 %v613
    %871 = vmatpush1.bf16.msra.mxu0 %v612
    %872 = vmatprep.subr.bf16.mxu0 %v611
    %873 = vmatpush1.bf16.msra.mxu0 %v610
    %874 = vmatprep.subr.bf16.mxu0 %v609
    %875 = vmatpush1.bf16.msra.mxu0 %v608
    %876 = vmatprep.subr.bf16.mxu0 %v607
    %877 = vmatpush1.bf16.msra.mxu0 %v606
    %878 = vmatprep.subr.bf16.mxu0 %v637
    %879 = vmatpush2.bf16.msra.mxu0 %v636
    %880 = vmatprep.subr.bf16.mxu0 %v635
    %881 = vmatpush2.bf16.msra.mxu0 %v634
    %882 = vmatprep.subr.bf16.mxu0 %v633
    %883 = vmatpush2.bf16.msra.mxu0 %v632
    %884 = vmatprep.subr.bf16.mxu0 %v631
    %885 = vmatpush2.bf16.msra.mxu0 %v630
    %886 = vmatprep.subr.bf16.mxu0 %v629
    %887 = vmatpush2.bf16.msra.mxu0 %v628
    %888 = vmatprep.subr.bf16.mxu0 %v627
    %889 = vmatpush2.bf16.msra.mxu0 %v626
    %890 = vmatprep.subr.bf16.mxu0 %v625
    %891 = vmatpush2.bf16.msra.mxu0 %v624
    %892 = vmatprep.subr.bf16.mxu0 %v623
    %893 = vmatpush2.bf16.msra.mxu0 %v622
    %894 = vmatprep.mubr.bf16.mxu0 %v75
    %895 = vmatmul.mubr.bf16.gmra.mxu0 %v74
    %v896 = vpop.f32.mrf.mxu0
    %v897 = vadd.f32 %v215, %v896
    %v898 = vpop.f32.mrf.mxu0
    %v899 = vadd.f32 %v219, %v898
    %v900 = vpop.f32.mrf.mxu0
    %v901 = vpop.f32.mrf.mxu0
    %902 = vdwg.mxu0
    %903 = vmatprep.subr.bf16.mxu0 %v653
    %904 = vmatpush1.bf16.msra.mxu0 %v652
    %905 = vmatprep.subr.bf16.mxu0 %v651
    %906 = vmatpush1.bf16.msra.mxu0 %v650
    %907 = vmatprep.subr.bf16.mxu0 %v649
    %908 = vmatpush1.bf16.msra.mxu0 %v648
    %909 = vmatprep.subr.bf16.mxu0 %v647
    %910 = vmatpush1.bf16.msra.mxu0 %v646
    %911 = vmatprep.subr.bf16.mxu0 %v645
    %912 = vmatpush1.bf16.msra.mxu0 %v644
    %913 = vmatprep.subr.bf16.mxu0 %v643
    %914 = vmatpush1.bf16.msra.mxu0 %v642
    %915 = vmatprep.subr.bf16.mxu0 %v641
    %916 = vmatpush1.bf16.msra.mxu0 %v640
    %917 = vmatprep.subr.bf16.mxu0 %v639
    %918 = vmatpush1.bf16.msra.mxu0 %v638
    %919 = vmatprep.subr.bf16.mxu0 %v669
    %920 = vmatpush2.bf16.msra.mxu0 %v668
    %921 = vmatprep.subr.bf16.mxu0 %v667
    %922 = vmatpush2.bf16.msra.mxu0 %v666
    %923 = vmatprep.subr.bf16.mxu0 %v665
    %924 = vmatpush2.bf16.msra.mxu0 %v664
    %925 = vmatprep.subr.bf16.mxu0 %v663
    %926 = vmatpush2.bf16.msra.mxu0 %v662
    %927 = vmatprep.subr.bf16.mxu0 %v661
    %928 = vmatpush2.bf16.msra.mxu0 %v660
    %929 = vmatprep.subr.bf16.mxu0 %v659
    %930 = vmatpush2.bf16.msra.mxu0 %v658
    %931 = vmatprep.subr.bf16.mxu0 %v657
    %932 = vmatpush2.bf16.msra.mxu0 %v656
    %933 = vmatprep.subr.bf16.mxu0 %v655
    %934 = vmatpush2.bf16.msra.mxu0 %v654
    %935 = vmatprep.mubr.bf16.mxu0 %v77
    %936 = vmatmul.mubr.bf16.gmra.mxu0 %v76
    %v937 = vpop.f32.mrf.mxu0
    %v938 = vadd.f32 %v897, %v937
    %v939 = vpop.f32.mrf.mxu0
    %v940 = vadd.f32 %v899, %v939
    %v941 = vpop.f32.mrf.mxu0
    %v942 = vpop.f32.mrf.mxu0
    %943 = vdwg.mxu0
    %944 = vmatprep.subr.bf16.mxu0 %v685
    %945 = vmatpush1.bf16.msra.mxu0 %v684
    %946 = vmatprep.subr.bf16.mxu0 %v683
    %947 = vmatpush1.bf16.msra.mxu0 %v682
    %948 = vmatprep.subr.bf16.mxu0 %v681
    %949 = vmatpush1.bf16.msra.mxu0 %v680
    %950 = vmatprep.subr.bf16.mxu0 %v679
    %951 = vmatpush1.bf16.msra.mxu0 %v678
    %952 = vmatprep.subr.bf16.mxu0 %v677
    %953 = vmatpush1.bf16.msra.mxu0 %v676
    %954 = vmatprep.subr.bf16.mxu0 %v675
    %955 = vmatpush1.bf16.msra.mxu0 %v674
    %956 = vmatprep.subr.bf16.mxu0 %v673
    %957 = vmatpush1.bf16.msra.mxu0 %v672
    %958 = vmatprep.subr.bf16.mxu0 %v671
    %959 = vmatpush1.bf16.msra.mxu0 %v670
    %960 = vmatprep.subr.bf16.mxu0 %v701
    %961 = vmatpush2.bf16.msra.mxu0 %v700
    %962 = vmatprep.subr.bf16.mxu0 %v699
    %963 = vmatpush2.bf16.msra.mxu0 %v698
    %964 = vmatprep.subr.bf16.mxu0 %v697
    %965 = vmatpush2.bf16.msra.mxu0 %v696
    %966 = vmatprep.subr.bf16.mxu0 %v695
    %967 = vmatpush2.bf16.msra.mxu0 %v694
    %968 = vmatprep.subr.bf16.mxu0 %v693
    %969 = vmatpush2.bf16.msra.mxu0 %v692
    %970 = vmatprep.subr.bf16.mxu0 %v691
    %971 = vmatpush2.bf16.msra.mxu0 %v690
    %972 = vmatprep.subr.bf16.mxu0 %v689
    %973 = vmatpush2.bf16.msra.mxu0 %v688
    %974 = vmatprep.subr.bf16.mxu0 %v687
    %975 = vmatpush2.bf16.msra.mxu0 %v686
    %976 = vmatprep.mubr.bf16.mxu0 %v79
    %977 = vmatmul.mubr.bf16.gmra.mxu0 %v78
    %v978 = vpop.f32.mrf.mxu0
    %v979 = vadd.f32 %v938, %v978
    %v980 = vpop.f32.mrf.mxu0
    %v981 = vadd.f32 %v940, %v980
    %v982 = vpop.f32.mrf.mxu0
    %v983 = vpop.f32.mrf.mxu0
    %984 = vdwg.mxu0
    %985 = vmatprep.subr.bf16.mxu0 %v717
    %986 = vmatpush1.bf16.msra.mxu0 %v716
    %987 = vmatprep.subr.bf16.mxu0 %v715
    %988 = vmatpush1.bf16.msra.mxu0 %v714
    %989 = vmatprep.subr.bf16.mxu0 %v713
    %990 = vmatpush1.bf16.msra.mxu0 %v712
    %991 = vmatprep.subr.bf16.mxu0 %v711
    %992 = vmatpush1.bf16.msra.mxu0 %v710
    %993 = vmatprep.subr.bf16.mxu0 %v709
    %994 = vmatpush1.bf16.msra.mxu0 %v708
    %995 = vmatprep.subr.bf16.mxu0 %v707
    %996 = vmatpush1.bf16.msra.mxu0 %v706
    %997 = vmatprep.subr.bf16.mxu0 %v705
    %998 = vmatpush1.bf16.msra.mxu0 %v704
    %999 = vmatprep.subr.bf16.mxu0 %v703
    %1000 = vmatpush1.bf16.msra.mxu0 %v702
    %1001 = vmatprep.subr.bf16.mxu0 %v733
    %1002 = vmatpush2.bf16.msra.mxu0 %v732
    %1003 = vmatprep.subr.bf16.mxu0 %v731
    %1004 = vmatpush2.bf16.msra.mxu0 %v730
    %1005 = vmatprep.subr.bf16.mxu0 %v729
    %1006 = vmatpush2.bf16.msra.mxu0 %v728
    %1007 = vmatprep.subr.bf16.mxu0 %v727
    %1008 = vmatpush2.bf16.msra.mxu0 %v726
    %1009 = vmatprep.subr.bf16.mxu0 %v725
    %1010 = vmatpush2.bf16.msra.mxu0 %v724
    %1011 = vmatprep.subr.bf16.mxu0 %v723
    %1012 = vmatpush2.bf16.msra.mxu0 %v722
    %1013 = vmatprep.subr.bf16.mxu0 %v721
    %1014 = vmatpush2.bf16.msra.mxu0 %v720
    %1015 = vmatprep.subr.bf16.mxu0 %v719
    %1016 = vmatpush2.bf16.msra.mxu0 %v718
    %1017 = vmatprep.mubr.bf16.mxu0 %v81
    %1018 = vmatmul.mubr.bf16.gmra.mxu0 %v80
    %v1019 = vpop.f32.mrf.mxu0
    %v1020 = vadd.f32 %v979, %v1019
    %v1021 = vpop.f32.mrf.mxu0
    %v1022 = vadd.f32 %v981, %v1021
    %v1023 = vpop.f32.mrf.mxu0
    %v1024 = vpop.f32.mrf.mxu0
    %1025 = vdwg.mxu0
    %v1026 = vmax.f32 %v1020, 0.0
    %v1027 = vmax.f32 %v1022, 0.0
    %v1028 = vpack.c.bf16 %v1026, %v1026
    %v1029 = vpack.c.bf16 %v1027, %v1027
    %v1030 = vld [vmem:[%s4] sm:$0xf]
    %v1031 = vld [vmem:[%s4 + $0x4] sm:$0xf]
    %v1032 = vld [vmem:[%s4 + $0x8] sm:$0xf]
    %v1033 = vld [vmem:[%s4 + $0xc] sm:$0xf]
    %v1034 = vld [vmem:[%s4 + $0x10] sm:$0xf]
    %v1035 = vld [vmem:[%s4 + $0x14] sm:$0xf]
    %v1036 = vld [vmem:[%s4 + $0x18] sm:$0xf]
    %v1037 = vld [vmem:[%s4 + $0x1c] sm:$0xf]
    %v1038 = vld [vmem:[%s4 + $0x20] sm:$0xf]
    %v1039 = vld [vmem:[%s4 + $0x24] sm:$0xf]
    %v1040 = vld [vmem:[%s4 + $0x28] sm:$0xf]
    %v1041 = vld [vmem:[%s4 + $0x2c] sm:$0xf]
    %v1042 = vld [vmem:[%s4 + $0x30] sm:$0xf]
    %v1043 = vld [vmem:[%s4 + $0x34] sm:$0xf]
    %v1044 = vld [vmem:[%s4 + $0x38] sm:$0xf]
    %v1045 = vld [vmem:[%s4 + $0x3c] sm:$0xf]
    %v1046 = vld [vmem:[%s4 + $0x40] sm:$0xf]
    %v1047 = vld [vmem:[%s4 + $0x44] sm:$0xf]
    %v1048 = vld [vmem:[%s4 + $0x48] sm:$0xf]
    %v1049 = vld [vmem:[%s4 + $0x4c] sm:$0xf]
    %v1050 = vld [vmem:[%s4 + $0x50] sm:$0xf]
    %v1051 = vld [vmem:[%s4 + $0x54] sm:$0xf]
    %v1052 = vld [vmem:[%s4 + $0x58] sm:$0xf]
    %v1053 = vld [vmem:[%s4 + $0x5c] sm:$0xf]
    %v1054 = vld [vmem:[%s4 + $0x60] sm:$0xf]
    %v1055 = vld [vmem:[%s4 + $0x64] sm:$0xf]
    %v1056 = vld [vmem:[%s4 + $0x68] sm:$0xf]
    %v1057 = vld [vmem:[%s4 + $0x6c] sm:$0xf]
    %v1058 = vld [vmem:[%s4 + $0x70] sm:$0xf]
    %v1059 = vld [vmem:[%s4 + $0x74] sm:$0xf]
    %v1060 = vld [vmem:[%s4 + $0x78] sm:$0xf]
    %v1061 = vld [vmem:[%s4 + $0x7c] sm:$0xf]
    %v1062 = vld [vmem:[%s5] sm:$0x1]
    %v1064 = vlaneseq
    %v1065 = vshrl.u32 %v1064, 7
    %v1066 = vsub.s32 0, %v1065
    %v1067 = vrot.slane %v1062, %v1066
    %v1101 = vunpack.c.l.b16 %v1030
    %v1102 = vunpack.c.l.b16 %v1031
    %v1103 = vunpack.c.l.b16 %v1032
    %v1104 = vunpack.c.l.b16 %v1033
    %v1105 = vunpack.c.l.b16 %v1034
    %v1106 = vunpack.c.l.b16 %v1035
    %v1107 = vunpack.c.l.b16 %v1036
    %v1108 = vunpack.c.l.b16 %v1037
    %v1109 = vunpack.c.l.b16 %v1038
    %v1110 = vunpack.c.l.b16 %v1039
    %v1111 = vunpack.c.l.b16 %v1040
    %v1112 = vunpack.c.l.b16 %v1041
    %v1113 = vunpack.c.l.b16 %v1042
    %v1114 = vunpack.c.l.b16 %v1043
    %v1115 = vunpack.c.l.b16 %v1044
    %v1116 = vunpack.c.l.b16 %v1045
    %v1117 = vunpack.c.l.b16 %v1046
    %v1118 = vunpack.c.l.b16 %v1047
    %v1119 = vunpack.c.l.b16 %v1048
    %v1120 = vunpack.c.l.b16 %v1049
    %v1121 = vunpack.c.l.b16 %v1050
    %v1122 = vunpack.c.l.b16 %v1051
    %v1123 = vunpack.c.l.b16 %v1052
    %v1124 = vunpack.c.l.b16 %v1053
    %v1125 = vunpack.c.l.b16 %v1054
    %v1126 = vunpack.c.l.b16 %v1055
    %v1127 = vunpack.c.l.b16 %v1056
    %v1128 = vunpack.c.l.b16 %v1057
    %v1129 = vunpack.c.l.b16 %v1058
    %v1130 = vunpack.c.l.b16 %v1059
    %v1131 = vunpack.c.l.b16 %v1060
    %v1132 = vunpack.c.l.b16 %v1061
    %v1133 = vpack.c.b16 %v1102, %v1101
    %v1134 = vpack.c.b16 %v1104, %v1103
    %v1135 = vpack.c.b16 %v1106, %v1105
    %v1136 = vpack.c.b16 %v1108, %v1107
    %v1137 = vpack.c.b16 %v1110, %v1109
    %v1138 = vpack.c.b16 %v1112, %v1111
    %v1139 = vpack.c.b16 %v1114, %v1113
    %v1140 = vpack.c.b16 %v1116, %v1115
    %v1141 = vpack.c.b16 %v1118, %v1117
    %v1142 = vpack.c.b16 %v1120, %v1119
    %v1143 = vpack.c.b16 %v1122, %v1121
    %v1144 = vpack.c.b16 %v1124, %v1123
    %v1145 = vpack.c.b16 %v1126, %v1125
    %v1146 = vpack.c.b16 %v1128, %v1127
    %v1147 = vpack.c.b16 %v1130, %v1129
    %v1148 = vpack.c.b16 %v1132, %v1131
    %1165 = vmatprep.subr.bf16.mxu0 0
    %1166 = vmatpush1.bf16.msra.mxu0 %v1140
    %1167 = vmatprep.subr.bf16.mxu0 0
    %1168 = vmatpush1.bf16.msra.mxu0 %v1139
    %1169 = vmatprep.subr.bf16.mxu0 0
    %1170 = vmatpush1.bf16.msra.mxu0 %v1138
    %1171 = vmatprep.subr.bf16.mxu0 0
    %1172 = vmatpush1.bf16.msra.mxu0 %v1137
    %1173 = vmatprep.subr.bf16.mxu0 0
    %1174 = vmatpush1.bf16.msra.mxu0 %v1136
    %1175 = vmatprep.subr.bf16.mxu0 0
    %1176 = vmatpush1.bf16.msra.mxu0 %v1135
    %1177 = vmatprep.subr.bf16.mxu0 0
    %1178 = vmatpush1.bf16.msra.mxu0 %v1134
    %1179 = vmatprep.subr.bf16.mxu0 0
    %1180 = vmatpush1.bf16.msra.mxu0 %v1133
    %1181 = vmatprep.subr.bf16.mxu0 0
    %1182 = vmatpush2.bf16.msra.mxu0 %v1148
    %1183 = vmatprep.subr.bf16.mxu0 0
    %1184 = vmatpush2.bf16.msra.mxu0 %v1147
    %1185 = vmatprep.subr.bf16.mxu0 0
    %1186 = vmatpush2.bf16.msra.mxu0 %v1146
    %1187 = vmatprep.subr.bf16.mxu0 0
    %1188 = vmatpush2.bf16.msra.mxu0 %v1145
    %1189 = vmatprep.subr.bf16.mxu0 0
    %1190 = vmatpush2.bf16.msra.mxu0 %v1144
    %1191 = vmatprep.subr.bf16.mxu0 0
    %1192 = vmatpush2.bf16.msra.mxu0 %v1143
    %1193 = vmatprep.subr.bf16.mxu0 0
    %1194 = vmatpush2.bf16.msra.mxu0 %v1142
    %1195 = vmatprep.subr.bf16.mxu0 0
    %1196 = vmatpush2.bf16.msra.mxu0 %v1141
    %1197 = vmatprep.mubr.bf16.mxu0 %v1029
    %1198 = vmatmul.mubr.bf16.gmra.mxu0 %v1028
    %v1199 = vpop.f32.mrf.mxu0
    %v1200 = vadd.f32 %v1067, %v1199
    %v1201 = vpop.f32.mrf.mxu0
    %v1202 = vpop.f32.mrf.mxu0
    %v1203 = vpop.f32.mrf.mxu0
    %1204 = vdwg.mxu0
    %v1205 = vmul.f32 %v1200, 0.5
    %v1206 = vmul.f32 %v1205, 1.442695
    %v1207 = vpow.pop %v1206
    %v1208 = vld [vmem:[%s1] sm:$0xff]
    %1210 = vrot.lane.b32.xlu0 %v1208, 64
    %v1211 = vpop.permute.xlu0 %1210
    %v1213 = vmul.f32 %v1207, %v1211
    %1215 = vrot.lane.b32.xlu0 %v1213, 64
    %v1216 = vpop.permute.xlu0 %1215
    %v1218 = vadd.f32 %v1200, %v1216
    %v1219 = vpack.c.bf16 %v1218, %v1218
    %v1220 = vld [vmem:[%s6] sm:$0xff]
    %v1221 = vld [vmem:[%s6 + $0x8] sm:$0xff]
    %v1222 = vld [vmem:[%s6 + $0x10] sm:$0xff]
    %v1223 = vld [vmem:[%s6 + $0x18] sm:$0xff]
    %v1224 = vld [vmem:[%s6 + $0x20] sm:$0xff]
    %v1225 = vld [vmem:[%s6 + $0x28] sm:$0xff]
    %v1226 = vld [vmem:[%s6 + $0x30] sm:$0xff]
    %v1227 = vld [vmem:[%s6 + $0x38] sm:$0xff]
    %v1228 = vld [vmem:[%s7] sm:$0x3]
    %v1230 = vlaneseq
    %v1231 = vshrl.u32 %v1230, 7
    %v1232 = vsub.s32 0, %v1231
    %v1233 = vrot.slane %v1228, %v1232
    %v1234 = vlaneseq
    %v1235 = vshrl.u32 %v1234, 7
    %v1236 = vsub.s32 1, %v1235
    %v1237 = vrot.slane %v1228, %v1236
    %v1248 = vunpack.c.l.b16 %v1220
    %v1249 = vunpack.c.h.b16 %v1220
    %v1250 = vunpack.c.l.b16 %v1221
    %v1251 = vunpack.c.h.b16 %v1221
    %v1252 = vunpack.c.l.b16 %v1222
    %v1253 = vunpack.c.h.b16 %v1222
    %v1254 = vunpack.c.l.b16 %v1223
    %v1255 = vunpack.c.h.b16 %v1223
    %v1256 = vunpack.c.l.b16 %v1224
    %v1257 = vunpack.c.h.b16 %v1224
    %v1258 = vunpack.c.l.b16 %v1225
    %v1259 = vunpack.c.h.b16 %v1225
    %v1260 = vunpack.c.l.b16 %v1226
    %v1261 = vunpack.c.h.b16 %v1226
    %v1262 = vunpack.c.l.b16 %v1227
    %v1263 = vunpack.c.h.b16 %v1227
    %v1264 = vpack.c.b16 %v1250, %v1248
    %v1265 = vpack.c.b16 %v1251, %v1249
    %v1266 = vpack.c.b16 %v1254, %v1252
    %v1267 = vpack.c.b16 %v1255, %v1253
    %v1268 = vpack.c.b16 %v1258, %v1256
    %v1269 = vpack.c.b16 %v1259, %v1257
    %v1270 = vpack.c.b16 %v1262, %v1260
    %v1271 = vpack.c.b16 %v1263, %v1261
    %vm1280 = vcmask 523264
    %v1282 = vsel %vm1280, %v1219, 0
    %1284 = vmatprep.subr.bf16.mxu0 0
    %1285 = vmatpush1.bf16.msra.mxu0 0
    %1286 = vmatprep.subr.bf16.mxu0 0
    %1287 = vmatpush1.bf16.msra.mxu0 0
    %1288 = vmatprep.subr.bf16.mxu0 0
    %1289 = vmatpush1.bf16.msra.mxu0 0
    %1290 = vmatprep.subr.bf16.mxu0 0
    %1291 = vmatpush1.bf16.msra.mxu0 0
    %1292 = vmatprep.subr.bf16.mxu0 %v1271
    %1293 = vmatpush1.bf16.msra.mxu0 %v1270
    %1294 = vmatprep.subr.bf16.mxu0 %v1269
    %1295 = vmatpush1.bf16.msra.mxu0 %v1268
    %1296 = vmatprep.subr.bf16.mxu0 %v1267
    %1297 = vmatpush1.bf16.msra.mxu0 %v1266
    %1298 = vmatprep.subr.bf16.mxu0 %v1265
    %1299 = vmatpush1.bf16.msra.mxu0 %v1264
    %1300 = vmatprep.subr.bf16.mxu0 0
    %1301 = vmatpush2.bf16.msra.mxu0 0
    %1302 = vmatprep.subr.bf16.mxu0 0
    %1303 = vmatpush2.bf16.msra.mxu0 0
    %1304 = vmatprep.subr.bf16.mxu0 0
    %1305 = vmatpush2.bf16.msra.mxu0 0
    %1306 = vmatprep.subr.bf16.mxu0 0
    %1307 = vmatpush2.bf16.msra.mxu0 0
    %1308 = vmatprep.subr.bf16.mxu0 0
    %1309 = vmatpush2.bf16.msra.mxu0 0
    %1310 = vmatprep.subr.bf16.mxu0 0
    %1311 = vmatpush2.bf16.msra.mxu0 0
    %1312 = vmatprep.subr.bf16.mxu0 0
    %1313 = vmatpush2.bf16.msra.mxu0 0
    %1314 = vmatprep.subr.bf16.mxu0 0
    %1315 = vmatpush2.bf16.msra.mxu0 0
    %1316 = vmatprep.mubr.bf16.mxu0 0
    %1317 = vmatmul.mubr.bf16.gmra.mxu0 %v1282
    %v1318 = vpop.f32.mrf.mxu0
    %v1319 = vadd.f32 %v1233, %v1318
    %v1320 = vpop.f32.mrf.mxu0
    %v1321 = vadd.f32 %v1237, %v1320
    %v1322 = vpop.f32.mrf.mxu0
    %v1323 = vpop.f32.mrf.mxu0
    %1324 = vdwg.mxu0
    %v1325 = vmax.f32 %v1319, 0.0
    %v1326 = vmax.f32 %v1321, 0.0
    %v1327 = vpack.c.bf16 %v1325, %v1325
    %v1328 = vpack.c.bf16 %v1326, %v1326
    %v1329 = vld [vmem:[#allocation4] sm:$0xff]
    %v1330 = vld [vmem:[#allocation4 + $0x8] sm:$0xff]
    %v1331 = vld [vmem:[#allocation4 + $0x10] sm:$0xff]
    %v1332 = vld [vmem:[#allocation4 + $0x18] sm:$0xff]
    %v1333 = vld [vmem:[#allocation4 + $0x20] sm:$0xff]
    %v1334 = vld [vmem:[#allocation4 + $0x28] sm:$0xff]
    %v1335 = vld [vmem:[#allocation4 + $0x30] sm:$0xff]
    %v1336 = vld [vmem:[#allocation4 + $0x38] sm:$0xff]
    %v1337 = vld [vmem:[#allocation4 + $0x40] sm:$0xff]
    %v1338 = vld [vmem:[#allocation4 + $0x48] sm:$0xff]
    %v1339 = vld [vmem:[#allocation4 + $0x50] sm:$0xff]
    %v1340 = vld [vmem:[#allocation4 + $0x58] sm:$0xff]
    %v1341 = vld [vmem:[#allocation4 + $0x60] sm:$0xff]
    %v1342 = vld [vmem:[#allocation4 + $0x68] sm:$0xff]
    %v1343 = vld [vmem:[#allocation4 + $0x70] sm:$0xff]
    %v1344 = vld [vmem:[#allocation4 + $0x78] sm:$0xff]
    %v1345 = vld [vmem:[#allocation4 + $0x80] sm:$0xff]
    %v1346 = vld [vmem:[#allocation4 + $0x88] sm:$0xff]
    %v1347 = vld [vmem:[#allocation4 + $0x90] sm:$0xff]
    %v1348 = vld [vmem:[#allocation4 + $0x98] sm:$0xff]
    %v1349 = vld [vmem:[#allocation4 + $0xa0] sm:$0xff]
    %v1350 = vld [vmem:[#allocation4 + $0xa8] sm:$0xff]
    %v1351 = vld [vmem:[#allocation4 + $0xb0] sm:$0xff]
    %v1352 = vld [vmem:[#allocation4 + $0xb8] sm:$0xff]
    %v1353 = vld [vmem:[#allocation4 + $0xc0] sm:$0xff]
    %v1354 = vld [vmem:[#allocation4 + $0xc8] sm:$0xff]
    %v1355 = vld [vmem:[#allocation4 + $0xd0] sm:$0xff]
    %v1356 = vld [vmem:[#allocation4 + $0xd8] sm:$0xff]
    %v1357 = vld [vmem:[#allocation4 + $0xe0] sm:$0xff]
    %v1358 = vld [vmem:[#allocation4 + $0xe8] sm:$0xff]
    %v1359 = vld [vmem:[#allocation4 + $0xf0] sm:$0xff]
    %v1360 = vld [vmem:[#allocation4 + $0xf8] sm:$0xff]
    %v1361 = vld [vmem:[#allocation4 + $0x100] sm:$0xff]
    %v1362 = vld [vmem:[#allocation4 + $0x108] sm:$0xff]
    %v1363 = vld [vmem:[#allocation4 + $0x110] sm:$0xff]
    %v1364 = vld [vmem:[#allocation4 + $0x118] sm:$0xff]
    %v1365 = vld [vmem:[#allocation4 + $0x120] sm:$0xff]
    %v1366 = vld [vmem:[#allocation4 + $0x128] sm:$0xff]
    %v1367 = vld [vmem:[#allocation4 + $0x130] sm:$0xff]
    %v1368 = vld [vmem:[#allocation4 + $0x138] sm:$0xff]
    %v1369 = vld [vmem:[#allocation4 + $0x140] sm:$0xff]
    %v1370 = vld [vmem:[#allocation4 + $0x148] sm:$0xff]
    %v1371 = vld [vmem:[#allocation4 + $0x150] sm:$0xff]
    %v1372 = vld [vmem:[#allocation4 + $0x158] sm:$0xff]
    %v1373 = vld [vmem:[#allocation4 + $0x160] sm:$0xff]
    %v1374 = vld [vmem:[#allocation4 + $0x168] sm:$0xff]
    %v1375 = vld [vmem:[#allocation4 + $0x170] sm:$0xff]
    %v1376 = vld [vmem:[#allocation4 + $0x178] sm:$0xff]
    %v1377 = vld [vmem:[#allocation4 + $0x180] sm:$0xff]
    %v1378 = vld [vmem:[#allocation4 + $0x188] sm:$0xff]
    %v1379 = vld [vmem:[#allocation4 + $0x190] sm:$0xff]
    %v1380 = vld [vmem:[#allocation4 + $0x198] sm:$0xff]
    %v1381 = vld [vmem:[#allocation4 + $0x1a0] sm:$0xff]
    %v1382 = vld [vmem:[#allocation4 + $0x1a8] sm:$0xff]
    %v1383 = vld [vmem:[#allocation4 + $0x1b0] sm:$0xff]
    %v1384 = vld [vmem:[#allocation4 + $0x1b8] sm:$0xff]
    %v1385 = vld [vmem:[#allocation4 + $0x1c0] sm:$0xff]
    %v1386 = vld [vmem:[#allocation4 + $0x1c8] sm:$0xff]
    %v1387 = vld [vmem:[#allocation4 + $0x1d0] sm:$0xff]
    %v1388 = vld [vmem:[#allocation4 + $0x1d8] sm:$0xff]
    %v1389 = vld [vmem:[#allocation4 + $0x1e0] sm:$0xff]
    %v1390 = vld [vmem:[#allocation4 + $0x1e8] sm:$0xff]
    %v1391 = vld [vmem:[#allocation4 + $0x1f0] sm:$0xff]
    %v1392 = vld [vmem:[#allocation4 + $0x1f8] sm:$0xff]
    %v1393 = vld [vmem:[#allocation4 + $0x200] sm:$0xff]
    %v1394 = vld [vmem:[#allocation4 + $0x208] sm:$0xff]
    %v1395 = vld [vmem:[#allocation4 + $0x210] sm:$0xff]
    %v1396 = vld [vmem:[#allocation4 + $0x218] sm:$0xff]
    %v1397 = vld [vmem:[#allocation4 + $0x220] sm:$0xff]
    %v1398 = vld [vmem:[#allocation4 + $0x228] sm:$0xff]
    %v1399 = vld [vmem:[#allocation4 + $0x230] sm:$0xff]
    %v1400 = vld [vmem:[#allocation4 + $0x238] sm:$0xff]
    %v1401 = vld [vmem:[#allocation4 + $0x240] sm:$0xff]
    %v1402 = vld [vmem:[#allocation4 + $0x248] sm:$0xff]
    %v1403 = vld [vmem:[#allocation4 + $0x250] sm:$0xff]
    %v1404 = vld [vmem:[#allocation4 + $0x258] sm:$0xff]
    %v1405 = vld [vmem:[#allocation4 + $0x260] sm:$0xff]
    %v1406 = vld [vmem:[#allocation4 + $0x268] sm:$0xff]
    %v1407 = vld [vmem:[#allocation4 + $0x270] sm:$0xff]
    %v1408 = vld [vmem:[#allocation4 + $0x278] sm:$0xff]
    %v1409 = vld [vmem:[#allocation4 + $0x280] sm:$0xff]
    %v1410 = vld [vmem:[#allocation4 + $0x288] sm:$0xff]
    %v1411 = vld [vmem:[#allocation4 + $0x290] sm:$0xff]
    %v1412 = vld [vmem:[#allocation4 + $0x298] sm:$0xff]
    %v1413 = vld [vmem:[#allocation4 + $0x2a0] sm:$0xff]
    %v1414 = vld [vmem:[#allocation4 + $0x2a8] sm:$0xff]
    %v1415 = vld [vmem:[#allocation4 + $0x2b0] sm:$0xff]
    %v1416 = vld [vmem:[#allocation4 + $0x2b8] sm:$0xff]
    %v1417 = vld [vmem:[#allocation4 + $0x2c0] sm:$0xff]
    %v1418 = vld [vmem:[#allocation4 + $0x2c8] sm:$0xff]
    %v1419 = vld [vmem:[#allocation4 + $0x2d0] sm:$0xff]
    %v1420 = vld [vmem:[#allocation4 + $0x2d8] sm:$0xff]
    %v1421 = vld [vmem:[#allocation4 + $0x2e0] sm:$0xff]
    %v1422 = vld [vmem:[#allocation4 + $0x2e8] sm:$0xff]
    %v1423 = vld [vmem:[#allocation4 + $0x2f0] sm:$0xff]
    %v1424 = vld [vmem:[#allocation4 + $0x2f8] sm:$0xff]
    %v1425 = vld [vmem:[#allocation4 + $0x300] sm:$0xff]
    %v1426 = vld [vmem:[#allocation4 + $0x308] sm:$0xff]
    %v1427 = vld [vmem:[#allocation4 + $0x310] sm:$0xff]
    %v1428 = vld [vmem:[#allocation4 + $0x318] sm:$0xff]
    %v1429 = vld [vmem:[#allocation4 + $0x320] sm:$0xff]
    %v1430 = vld [vmem:[#allocation4 + $0x328] sm:$0xff]
    %v1431 = vld [vmem:[#allocation4 + $0x330] sm:$0xff]
    %v1432 = vld [vmem:[#allocation4 + $0x338] sm:$0xff]
    %v1433 = vld [vmem:[#allocation4 + $0x340] sm:$0xff]
    %v1434 = vld [vmem:[#allocation4 + $0x348] sm:$0xff]
    %v1435 = vld [vmem:[#allocation4 + $0x350] sm:$0xff]
    %v1436 = vld [vmem:[#allocation4 + $0x358] sm:$0xff]
    %v1437 = vld [vmem:[#allocation4 + $0x360] sm:$0xff]
    %v1438 = vld [vmem:[#allocation4 + $0x368] sm:$0xff]
    %v1439 = vld [vmem:[#allocation4 + $0x370] sm:$0xff]
    %v1440 = vld [vmem:[#allocation4 + $0x378] sm:$0xff]
    %v1441 = vld [vmem:[#allocation4 + $0x380] sm:$0xff]
    %v1442 = vld [vmem:[#allocation4 + $0x388] sm:$0xff]
    %v1443 = vld [vmem:[#allocation4 + $0x390] sm:$0xff]
    %v1444 = vld [vmem:[#allocation4 + $0x398] sm:$0xff]
    %v1445 = vld [vmem:[#allocation4 + $0x3a0] sm:$0xff]
    %v1446 = vld [vmem:[#allocation4 + $0x3a8] sm:$0xff]
    %v1447 = vld [vmem:[#allocation4 + $0x3b0] sm:$0xff]
    %v1448 = vld [vmem:[#allocation4 + $0x3b8] sm:$0xff]
    %v1449 = vld [vmem:[#allocation4 + $0x3c0] sm:$0xff]
    %v1450 = vld [vmem:[#allocation4 + $0x3c8] sm:$0xff]
    %v1451 = vld [vmem:[#allocation4 + $0x3d0] sm:$0xff]
    %v1452 = vld [vmem:[#allocation4 + $0x3d8] sm:$0xff]
    %v1453 = vld [vmem:[#allocation4 + $0x3e0] sm:$0xff]
    %v1454 = vld [vmem:[#allocation4 + $0x3e8] sm:$0xff]
    %v1455 = vld [vmem:[#allocation4 + $0x3f0] sm:$0xff]
    %v1456 = vld [vmem:[#allocation4 + $0x3f8] sm:$0xff]
    %v1457 = vld [vmem:[%s9] sm:$0xff]
    %v1459 = vlaneseq
    %v1460 = vshrl.u32 %v1459, 7
    %v1461 = vsub.s32 0, %v1460
    %v1462 = vrot.slane %v1457, %v1461
    %v1463 = vlaneseq
    %v1464 = vshrl.u32 %v1463, 7
    %v1465 = vsub.s32 1, %v1464
    %v1466 = vrot.slane %v1457, %v1465
    %v1467 = vlaneseq
    %v1468 = vshrl.u32 %v1467, 7
    %v1469 = vsub.s32 2, %v1468
    %v1470 = vrot.slane %v1457, %v1469
    %v1471 = vlaneseq
    %v1472 = vshrl.u32 %v1471, 7
    %v1473 = vsub.s32 3, %v1472
    %v1474 = vrot.slane %v1457, %v1473
    %v1475 = vlaneseq
    %v1476 = vshrl.u32 %v1475, 7
    %v1477 = vsub.s32 4, %v1476
    %v1478 = vrot.slane %v1457, %v1477
    %v1479 = vlaneseq
    %v1480 = vshrl.u32 %v1479, 7
    %v1481 = vsub.s32 5, %v1480
    %v1482 = vrot.slane %v1457, %v1481
    %v1483 = vlaneseq
    %v1484 = vshrl.u32 %v1483, 7
    %v1485 = vsub.s32 6, %v1484
    %v1486 = vrot.slane %v1457, %v1485
    %v1487 = vlaneseq
    %v1488 = vshrl.u32 %v1487, 7
    %v1489 = vsub.s32 7, %v1488
    %v1490 = vrot.slane %v1457, %v1489
    %v1627 = vunpack.c.l.b16 %v1329
    %v1628 = vunpack.c.h.b16 %v1329
    %v1629 = vunpack.c.l.b16 %v1330
    %v1630 = vunpack.c.h.b16 %v1330
    %v1631 = vunpack.c.l.b16 %v1331
    %v1632 = vunpack.c.h.b16 %v1331
    %v1633 = vunpack.c.l.b16 %v1332
    %v1634 = vunpack.c.h.b16 %v1332
    %v1635 = vunpack.c.l.b16 %v1333
    %v1636 = vunpack.c.h.b16 %v1333
    %v1637 = vunpack.c.l.b16 %v1334
    %v1638 = vunpack.c.h.b16 %v1334
    %v1639 = vunpack.c.l.b16 %v1335
    %v1640 = vunpack.c.h.b16 %v1335
    %v1641 = vunpack.c.l.b16 %v1336
    %v1642 = vunpack.c.h.b16 %v1336
    %v1643 = vunpack.c.l.b16 %v1337
    %v1644 = vunpack.c.h.b16 %v1337
    %v1645 = vunpack.c.l.b16 %v1338
    %v1646 = vunpack.c.h.b16 %v1338
    %v1647 = vunpack.c.l.b16 %v1339
    %v1648 = vunpack.c.h.b16 %v1339
    %v1649 = vunpack.c.l.b16 %v1340
    %v1650 = vunpack.c.h.b16 %v1340
    %v1651 = vunpack.c.l.b16 %v1341
    %v1652 = vunpack.c.h.b16 %v1341
    %v1653 = vunpack.c.l.b16 %v1342
    %v1654 = vunpack.c.h.b16 %v1342
    %v1655 = vunpack.c.l.b16 %v1343
    %v1656 = vunpack.c.h.b16 %v1343
    %v1657 = vunpack.c.l.b16 %v1344
    %v1658 = vunpack.c.h.b16 %v1344
    %v1659 = vunpack.c.l.b16 %v1345
    %v1660 = vunpack.c.h.b16 %v1345
    %v1661 = vunpack.c.l.b16 %v1346
    %v1662 = vunpack.c.h.b16 %v1346
    %v1663 = vunpack.c.l.b16 %v1347
    %v1664 = vunpack.c.h.b16 %v1347
    %v1665 = vunpack.c.l.b16 %v1348
    %v1666 = vunpack.c.h.b16 %v1348
    %v1667 = vunpack.c.l.b16 %v1349
    %v1668 = vunpack.c.h.b16 %v1349
    %v1669 = vunpack.c.l.b16 %v1350
    %v1670 = vunpack.c.h.b16 %v1350
    %v1671 = vunpack.c.l.b16 %v1351
    %v1672 = vunpack.c.h.b16 %v1351
    %v1673 = vunpack.c.l.b16 %v1352
    %v1674 = vunpack.c.h.b16 %v1352
    %v1675 = vunpack.c.l.b16 %v1353
    %v1676 = vunpack.c.h.b16 %v1353
    %v1677 = vunpack.c.l.b16 %v1354
    %v1678 = vunpack.c.h.b16 %v1354
    %v1679 = vunpack.c.l.b16 %v1355
    %v1680 = vunpack.c.h.b16 %v1355
    %v1681 = vunpack.c.l.b16 %v1356
    %v1682 = vunpack.c.h.b16 %v1356
    %v1683 = vunpack.c.l.b16 %v1357
    %v1684 = vunpack.c.h.b16 %v1357
    %v1685 = vunpack.c.l.b16 %v1358
    %v1686 = vunpack.c.h.b16 %v1358
    %v1687 = vunpack.c.l.b16 %v1359
    %v1688 = vunpack.c.h.b16 %v1359
    %v1689 = vunpack.c.l.b16 %v1360
    %v1690 = vunpack.c.h.b16 %v1360
    %v1691 = vunpack.c.l.b16 %v1361
    %v1692 = vunpack.c.h.b16 %v1361
    %v1693 = vunpack.c.l.b16 %v1362
    %v1694 = vunpack.c.h.b16 %v1362
    %v1695 = vunpack.c.l.b16 %v1363
    %v1696 = vunpack.c.h.b16 %v1363
    %v1697 = vunpack.c.l.b16 %v1364
    %v1698 = vunpack.c.h.b16 %v1364
    %v1699 = vunpack.c.l.b16 %v1365
    %v1700 = vunpack.c.h.b16 %v1365
    %v1701 = vunpack.c.l.b16 %v1366
    %v1702 = vunpack.c.h.b16 %v1366
    %v1703 = vunpack.c.l.b16 %v1367
    %v1704 = vunpack.c.h.b16 %v1367
    %v1705 = vunpack.c.l.b16 %v1368
    %v1706 = vunpack.c.h.b16 %v1368
    %v1707 = vunpack.c.l.b16 %v1369
    %v1708 = vunpack.c.h.b16 %v1369
    %v1709 = vunpack.c.l.b16 %v1370
    %v1710 = vunpack.c.h.b16 %v1370
    %v1711 = vunpack.c.l.b16 %v1371
    %v1712 = vunpack.c.h.b16 %v1371
    %v1713 = vunpack.c.l.b16 %v1372
    %v1714 = vunpack.c.h.b16 %v1372
    %v1715 = vunpack.c.l.b16 %v1373
    %v1716 = vunpack.c.h.b16 %v1373
    %v1717 = vunpack.c.l.b16 %v1374
    %v1718 = vunpack.c.h.b16 %v1374
    %v1719 = vunpack.c.l.b16 %v1375
    %v1720 = vunpack.c.h.b16 %v1375
    %v1721 = vunpack.c.l.b16 %v1376
    %v1722 = vunpack.c.h.b16 %v1376
    %v1723 = vunpack.c.l.b16 %v1377
    %v1724 = vunpack.c.h.b16 %v1377
    %v1725 = vunpack.c.l.b16 %v1378
    %v1726 = vunpack.c.h.b16 %v1378
    %v1727 = vunpack.c.l.b16 %v1379
    %v1728 = vunpack.c.h.b16 %v1379
    %v1729 = vunpack.c.l.b16 %v1380
    %v1730 = vunpack.c.h.b16 %v1380
    %v1731 = vunpack.c.l.b16 %v1381
    %v1732 = vunpack.c.h.b16 %v1381
    %v1733 = vunpack.c.l.b16 %v1382
    %v1734 = vunpack.c.h.b16 %v1382
    %v1735 = vunpack.c.l.b16 %v1383
    %v1736 = vunpack.c.h.b16 %v1383
    %v1737 = vunpack.c.l.b16 %v1384
    %v1738 = vunpack.c.h.b16 %v1384
    %v1739 = vunpack.c.l.b16 %v1385
    %v1740 = vunpack.c.h.b16 %v1385
    %v1741 = vunpack.c.l.b16 %v1386
    %v1742 = vunpack.c.h.b16 %v1386
    %v1743 = vunpack.c.l.b16 %v1387
    %v1744 = vunpack.c.h.b16 %v1387
    %v1745 = vunpack.c.l.b16 %v1388
    %v1746 = vunpack.c.h.b16 %v1388
    %v1747 = vunpack.c.l.b16 %v1389
    %v1748 = vunpack.c.h.b16 %v1389
    %v1749 = vunpack.c.l.b16 %v1390
    %v1750 = vunpack.c.h.b16 %v1390
    %v1751 = vunpack.c.l.b16 %v1391
    %v1752 = vunpack.c.h.b16 %v1391
    %v1753 = vunpack.c.l.b16 %v1392
    %v1754 = vunpack.c.h.b16 %v1392
    %v1755 = vunpack.c.l.b16 %v1393
    %v1756 = vunpack.c.h.b16 %v1393
    %v1757 = vunpack.c.l.b16 %v1394
    %v1758 = vunpack.c.h.b16 %v1394
    %v1759 = vunpack.c.l.b16 %v1395
    %v1760 = vunpack.c.h.b16 %v1395
    %v1761 = vunpack.c.l.b16 %v1396
    %v1762 = vunpack.c.h.b16 %v1396
    %v1763 = vunpack.c.l.b16 %v1397
    %v1764 = vunpack.c.h.b16 %v1397
    %v1765 = vunpack.c.l.b16 %v1398
    %v1766 = vunpack.c.h.b16 %v1398
    %v1767 = vunpack.c.l.b16 %v1399
    %v1768 = vunpack.c.h.b16 %v1399
    %v1769 = vunpack.c.l.b16 %v1400
    %v1770 = vunpack.c.h.b16 %v1400
    %v1771 = vunpack.c.l.b16 %v1401
    %v1772 = vunpack.c.h.b16 %v1401
    %v1773 = vunpack.c.l.b16 %v1402
    %v1774 = vunpack.c.h.b16 %v1402
    %v1775 = vunpack.c.l.b16 %v1403
    %v1776 = vunpack.c.h.b16 %v1403
    %v1777 = vunpack.c.l.b16 %v1404
    %v1778 = vunpack.c.h.b16 %v1404
    %v1779 = vunpack.c.l.b16 %v1405
    %v1780 = vunpack.c.h.b16 %v1405
    %v1781 = vunpack.c.l.b16 %v1406
    %v1782 = vunpack.c.h.b16 %v1406
    %v1783 = vunpack.c.l.b16 %v1407
    %v1784 = vunpack.c.h.b16 %v1407
    %v1785 = vunpack.c.l.b16 %v1408
    %v1786 = vunpack.c.h.b16 %v1408
    %v1787 = vunpack.c.l.b16 %v1409
    %v1788 = vunpack.c.h.b16 %v1409
    %v1789 = vunpack.c.l.b16 %v1410
    %v1790 = vunpack.c.h.b16 %v1410
    %v1791 = vunpack.c.l.b16 %v1411
    %v1792 = vunpack.c.h.b16 %v1411
    %v1793 = vunpack.c.l.b16 %v1412
    %v1794 = vunpack.c.h.b16 %v1412
    %v1795 = vunpack.c.l.b16 %v1413
    %v1796 = vunpack.c.h.b16 %v1413
    %v1797 = vunpack.c.l.b16 %v1414
    %v1798 = vunpack.c.h.b16 %v1414
    %v1799 = vunpack.c.l.b16 %v1415
    %v1800 = vunpack.c.h.b16 %v1415
    %v1801 = vunpack.c.l.b16 %v1416
    %v1802 = vunpack.c.h.b16 %v1416
    %v1803 = vunpack.c.l.b16 %v1417
    %v1804 = vunpack.c.h.b16 %v1417
    %v1805 = vunpack.c.l.b16 %v1418
    %v1806 = vunpack.c.h.b16 %v1418
    %v1807 = vunpack.c.l.b16 %v1419
    %v1808 = vunpack.c.h.b16 %v1419
    %v1809 = vunpack.c.l.b16 %v1420
    %v1810 = vunpack.c.h.b16 %v1420
    %v1811 = vunpack.c.l.b16 %v1421
    %v1812 = vunpack.c.h.b16 %v1421
    %v1813 = vunpack.c.l.b16 %v1422
    %v1814 = vunpack.c.h.b16 %v1422
    %v1815 = vunpack.c.l.b16 %v1423
    %v1816 = vunpack.c.h.b16 %v1423
    %v1817 = vunpack.c.l.b16 %v1424
    %v1818 = vunpack.c.h.b16 %v1424
    %v1819 = vunpack.c.l.b16 %v1425
    %v1820 = vunpack.c.h.b16 %v1425
    %v1821 = vunpack.c.l.b16 %v1426
    %v1822 = vunpack.c.h.b16 %v1426
    %v1823 = vunpack.c.l.b16 %v1427
    %v1824 = vunpack.c.h.b16 %v1427
    %v1825 = vunpack.c.l.b16 %v1428
    %v1826 = vunpack.c.h.b16 %v1428
    %v1827 = vunpack.c.l.b16 %v1429
    %v1828 = vunpack.c.h.b16 %v1429
    %v1829 = vunpack.c.l.b16 %v1430
    %v1830 = vunpack.c.h.b16 %v1430
    %v1831 = vunpack.c.l.b16 %v1431
    %v1832 = vunpack.c.h.b16 %v1431
    %v1833 = vunpack.c.l.b16 %v1432
    %v1834 = vunpack.c.h.b16 %v1432
    %v1835 = vunpack.c.l.b16 %v1433
    %v1836 = vunpack.c.h.b16 %v1433
    %v1837 = vunpack.c.l.b16 %v1434
    %v1838 = vunpack.c.h.b16 %v1434
    %v1839 = vunpack.c.l.b16 %v1435
    %v1840 = vunpack.c.h.b16 %v1435
    %v1841 = vunpack.c.l.b16 %v1436
    %v1842 = vunpack.c.h.b16 %v1436
    %v1843 = vunpack.c.l.b16 %v1437
    %v1844 = vunpack.c.h.b16 %v1437
    %v1845 = vunpack.c.l.b16 %v1438
    %v1846 = vunpack.c.h.b16 %v1438
    %v1847 = vunpack.c.l.b16 %v1439
    %v1848 = vunpack.c.h.b16 %v1439
    %v1849 = vunpack.c.l.b16 %v1440
    %v1850 = vunpack.c.h.b16 %v1440
    %v1851 = vunpack.c.l.b16 %v1441
    %v1852 = vunpack.c.h.b16 %v1441
    %v1853 = vunpack.c.l.b16 %v1442
    %v1854 = vunpack.c.h.b16 %v1442
    %v1855 = vunpack.c.l.b16 %v1443
    %v1856 = vunpack.c.h.b16 %v1443
    %v1857 = vunpack.c.l.b16 %v1444
    %v1858 = vunpack.c.h.b16 %v1444
    %v1859 = vunpack.c.l.b16 %v1445
    %v1860 = vunpack.c.h.b16 %v1445
    %v1861 = vunpack.c.l.b16 %v1446
    %v1862 = vunpack.c.h.b16 %v1446
    %v1863 = vunpack.c.l.b16 %v1447
    %v1864 = vunpack.c.h.b16 %v1447
    %v1865 = vunpack.c.l.b16 %v1448
    %v1866 = vunpack.c.h.b16 %v1448
    %v1867 = vunpack.c.l.b16 %v1449
    %v1868 = vunpack.c.h.b16 %v1449
    %v1869 = vunpack.c.l.b16 %v1450
    %v1870 = vunpack.c.h.b16 %v1450
    %v1871 = vunpack.c.l.b16 %v1451
    %v1872 = vunpack.c.h.b16 %v1451
    %v1873 = vunpack.c.l.b16 %v1452
    %v1874 = vunpack.c.h.b16 %v1452
    %v1875 = vunpack.c.l.b16 %v1453
    %v1876 = vunpack.c.h.b16 %v1453
    %v1877 = vunpack.c.l.b16 %v1454
    %v1878 = vunpack.c.h.b16 %v1454
    %v1879 = vunpack.c.l.b16 %v1455
    %v1880 = vunpack.c.h.b16 %v1455
    %v1881 = vunpack.c.l.b16 %v1456
    %v1882 = vunpack.c.h.b16 %v1456
    %v1883 = vpack.c.b16 %v1635, %v1627
    %v1884 = vpack.c.b16 %v1636, %v1628
    %v1885 = vpack.c.b16 %v1637, %v1629
    %v1886 = vpack.c.b16 %v1638, %v1630
    %v1887 = vpack.c.b16 %v1639, %v1631
    %v1888 = vpack.c.b16 %v1640, %v1632
    %v1889 = vpack.c.b16 %v1641, %v1633
    %v1890 = vpack.c.b16 %v1642, %v1634
    %v1891 = vpack.c.b16 %v1651, %v1643
    %v1892 = vpack.c.b16 %v1652, %v1644
    %v1893 = vpack.c.b16 %v1653, %v1645
    %v1894 = vpack.c.b16 %v1654, %v1646
    %v1895 = vpack.c.b16 %v1655, %v1647
    %v1896 = vpack.c.b16 %v1656, %v1648
    %v1897 = vpack.c.b16 %v1657, %v1649
    %v1898 = vpack.c.b16 %v1658, %v1650
    %v1899 = vpack.c.b16 %v1667, %v1659
    %v1900 = vpack.c.b16 %v1668, %v1660
    %v1901 = vpack.c.b16 %v1669, %v1661
    %v1902 = vpack.c.b16 %v1670, %v1662
    %v1903 = vpack.c.b16 %v1671, %v1663
    %v1904 = vpack.c.b16 %v1672, %v1664
    %v1905 = vpack.c.b16 %v1673, %v1665
    %v1906 = vpack.c.b16 %v1674, %v1666
    %v1907 = vpack.c.b16 %v1683, %v1675
    %v1908 = vpack.c.b16 %v1684, %v1676
    %v1909 = vpack.c.b16 %v1685, %v1677
    %v1910 = vpack.c.b16 %v1686, %v1678
    %v1911 = vpack.c.b16 %v1687, %v1679
    %v1912 = vpack.c.b16 %v1688, %v1680
    %v1913 = vpack.c.b16 %v1689, %v1681
    %v1914 = vpack.c.b16 %v1690, %v1682
    %v1915 = vpack.c.b16 %v1699, %v1691
    %v1916 = vpack.c.b16 %v1700, %v1692
    %v1917 = vpack.c.b16 %v1701, %v1693
    %v1918 = vpack.c.b16 %v1702, %v1694
    %v1919 = vpack.c.b16 %v1703, %v1695
    %v1920 = vpack.c.b16 %v1704, %v1696
    %v1921 = vpack.c.b16 %v1705, %v1697
    %v1922 = vpack.c.b16 %v1706, %v1698
    %v1923 = vpack.c.b16 %v1715, %v1707
    %v1924 = vpack.c.b16 %v1716, %v1708
    %v1925 = vpack.c.b16 %v1717, %v1709
    %v1926 = vpack.c.b16 %v1718, %v1710
    %v1927 = vpack.c.b16 %v1719, %v1711
    %v1928 = vpack.c.b16 %v1720, %v1712
    %v1929 = vpack.c.b16 %v1721, %v1713
    %v1930 = vpack.c.b16 %v1722, %v1714
    %v1931 = vpack.c.b16 %v1731, %v1723
    %v1932 = vpack.c.b16 %v1732, %v1724
    %v1933 = vpack.c.b16 %v1733, %v1725
    %v1934 = vpack.c.b16 %v1734, %v1726
    %v1935 = vpack.c.b16 %v1735, %v1727
    %v1936 = vpack.c.b16 %v1736, %v1728
    %v1937 = vpack.c.b16 %v1737, %v1729
    %v1938 = vpack.c.b16 %v1738, %v1730
    %v1939 = vpack.c.b16 %v1747, %v1739
    %v1940 = vpack.c.b16 %v1748, %v1740
    %v1941 = vpack.c.b16 %v1749, %v1741
    %v1942 = vpack.c.b16 %v1750, %v1742
    %v1943 = vpack.c.b16 %v1751, %v1743
    %v1944 = vpack.c.b16 %v1752, %v1744
    %v1945 = vpack.c.b16 %v1753, %v1745
    %v1946 = vpack.c.b16 %v1754, %v1746
    %v1947 = vpack.c.b16 %v1763, %v1755
    %v1948 = vpack.c.b16 %v1764, %v1756
    %v1949 = vpack.c.b16 %v1765, %v1757
    %v1950 = vpack.c.b16 %v1766, %v1758
    %v1951 = vpack.c.b16 %v1767, %v1759
    %v1952 = vpack.c.b16 %v1768, %v1760
    %v1953 = vpack.c.b16 %v1769, %v1761
    %v1954 = vpack.c.b16 %v1770, %v1762
    %v1955 = vpack.c.b16 %v1779, %v1771
    %v1956 = vpack.c.b16 %v1780, %v1772
    %v1957 = vpack.c.b16 %v1781, %v1773
    %v1958 = vpack.c.b16 %v1782, %v1774
    %v1959 = vpack.c.b16 %v1783, %v1775
    %v1960 = vpack.c.b16 %v1784, %v1776
    %v1961 = vpack.c.b16 %v1785, %v1777
    %v1962 = vpack.c.b16 %v1786, %v1778
    %v1963 = vpack.c.b16 %v1795, %v1787
    %v1964 = vpack.c.b16 %v1796, %v1788
    %v1965 = vpack.c.b16 %v1797, %v1789
    %v1966 = vpack.c.b16 %v1798, %v1790
    %v1967 = vpack.c.b16 %v1799, %v1791
    %v1968 = vpack.c.b16 %v1800, %v1792
    %v1969 = vpack.c.b16 %v1801, %v1793
    %v1970 = vpack.c.b16 %v1802, %v1794
    %v1971 = vpack.c.b16 %v1811, %v1803
    %v1972 = vpack.c.b16 %v1812, %v1804
    %v1973 = vpack.c.b16 %v1813, %v1805
    %v1974 = vpack.c.b16 %v1814, %v1806
    %v1975 = vpack.c.b16 %v1815, %v1807
    %v1976 = vpack.c.b16 %v1816, %v1808
    %v1977 = vpack.c.b16 %v1817, %v1809
    %v1978 = vpack.c.b16 %v1818, %v1810
    %v1979 = vpack.c.b16 %v1827, %v1819
    %v1980 = vpack.c.b16 %v1828, %v1820
    %v1981 = vpack.c.b16 %v1829, %v1821
    %v1982 = vpack.c.b16 %v1830, %v1822
    %v1983 = vpack.c.b16 %v1831, %v1823
    %v1984 = vpack.c.b16 %v1832, %v1824
    %v1985 = vpack.c.b16 %v1833, %v1825
    %v1986 = vpack.c.b16 %v1834, %v1826
    %v1987 = vpack.c.b16 %v1843, %v1835
    %v1988 = vpack.c.b16 %v1844, %v1836
    %v1989 = vpack.c.b16 %v1845, %v1837
    %v1990 = vpack.c.b16 %v1846, %v1838
    %v1991 = vpack.c.b16 %v1847, %v1839
    %v1992 = vpack.c.b16 %v1848, %v1840
    %v1993 = vpack.c.b16 %v1849, %v1841
    %v1994 = vpack.c.b16 %v1850, %v1842
    %v1995 = vpack.c.b16 %v1859, %v1851
    %v1996 = vpack.c.b16 %v1860, %v1852
    %v1997 = vpack.c.b16 %v1861, %v1853
    %v1998 = vpack.c.b16 %v1862, %v1854
    %v1999 = vpack.c.b16 %v1863, %v1855
    %v2000 = vpack.c.b16 %v1864, %v1856
    %v2001 = vpack.c.b16 %v1865, %v1857
    %v2002 = vpack.c.b16 %v1866, %v1858
    %v2003 = vpack.c.b16 %v1875, %v1867
    %v2004 = vpack.c.b16 %v1876, %v1868
    %v2005 = vpack.c.b16 %v1877, %v1869
    %v2006 = vpack.c.b16 %v1878, %v1870
    %v2007 = vpack.c.b16 %v1879, %v1871
    %v2008 = vpack.c.b16 %v1880, %v1872
    %v2009 = vpack.c.b16 %v1881, %v1873
    %v2010 = vpack.c.b16 %v1882, %v1874
    %2139 = vmatprep.subr.bf16.mxu0 %v1940
    %2140 = vmatpush1.bf16.msra.mxu0 %v1939
    %2141 = vmatprep.subr.bf16.mxu0 %v1932
    %2142 = vmatpush1.bf16.msra.mxu0 %v1931
    %2143 = vmatprep.subr.bf16.mxu0 %v1924
    %2144 = vmatpush1.bf16.msra.mxu0 %v1923
    %2145 = vmatprep.subr.bf16.mxu0 %v1916
    %2146 = vmatpush1.bf16.msra.mxu0 %v1915
    %2147 = vmatprep.subr.bf16.mxu0 %v1908
    %2148 = vmatpush1.bf16.msra.mxu0 %v1907
    %2149 = vmatprep.subr.bf16.mxu0 %v1900
    %2150 = vmatpush1.bf16.msra.mxu0 %v1899
    %2151 = vmatprep.subr.bf16.mxu0 %v1892
    %2152 = vmatpush1.bf16.msra.mxu0 %v1891
    %2153 = vmatprep.subr.bf16.mxu0 %v1884
    %2154 = vmatpush1.bf16.msra.mxu0 %v1883
    %2155 = vmatprep.subr.bf16.mxu0 %v2004
    %2156 = vmatpush2.bf16.msra.mxu0 %v2003
    %2157 = vmatprep.subr.bf16.mxu0 %v1996
    %2158 = vmatpush2.bf16.msra.mxu0 %v1995
    %2159 = vmatprep.subr.bf16.mxu0 %v1988
    %2160 = vmatpush2.bf16.msra.mxu0 %v1987
    %2161 = vmatprep.subr.bf16.mxu0 %v1980
    %2162 = vmatpush2.bf16.msra.mxu0 %v1979
    %2163 = vmatprep.subr.bf16.mxu0 %v1972
    %2164 = vmatpush2.bf16.msra.mxu0 %v1971
    %2165 = vmatprep.subr.bf16.mxu0 %v1964
    %2166 = vmatpush2.bf16.msra.mxu0 %v1963
    %2167 = vmatprep.subr.bf16.mxu0 %v1956
    %2168 = vmatpush2.bf16.msra.mxu0 %v1955
    %2169 = vmatprep.subr.bf16.mxu0 %v1948
    %2170 = vmatpush2.bf16.msra.mxu0 %v1947
    %2171 = vmatprep.mubr.bf16.mxu0 %v1328
    %2172 = vmatmul.mubr.bf16.gmra.mxu0 %v1327
    %v2173 = vpop.f32.mrf.mxu0
    %v2174 = vadd.f32 %v1462, %v2173
    %v2175 = vpop.f32.mrf.mxu0
    %v2176 = vadd.f32 %v1466, %v2175
    %v2177 = vpop.f32.mrf.mxu0
    %v2178 = vpop.f32.mrf.mxu0
    %2179 = vdwg.mxu0
    %2180 = vmatprep.subr.bf16.mxu0 %v1942
    %2181 = vmatpush1.bf16.msra.mxu0 %v1941
    %2182 = vmatprep.subr.bf16.mxu0 %v1934
    %2183 = vmatpush1.bf16.msra.mxu0 %v1933
    %2184 = vmatprep.subr.bf16.mxu0 %v1926
    %2185 = vmatpush1.bf16.msra.mxu0 %v1925
    %2186 = vmatprep.subr.bf16.mxu0 %v1918
    %2187 = vmatpush1.bf16.msra.mxu0 %v1917
    %2188 = vmatprep.subr.bf16.mxu0 %v1910
    %2189 = vmatpush1.bf16.msra.mxu0 %v1909
    %2190 = vmatprep.subr.bf16.mxu0 %v1902
    %2191 = vmatpush1.bf16.msra.mxu0 %v1901
    %2192 = vmatprep.subr.bf16.mxu0 %v1894
    %2193 = vmatpush1.bf16.msra.mxu0 %v1893
    %2194 = vmatprep.subr.bf16.mxu0 %v1886
    %2195 = vmatpush1.bf16.msra.mxu0 %v1885
    %2196 = vmatprep.subr.bf16.mxu0 %v2006
    %2197 = vmatpush2.bf16.msra.mxu0 %v2005
    %2198 = vmatprep.subr.bf16.mxu0 %v1998
    %2199 = vmatpush2.bf16.msra.mxu0 %v1997
    %2200 = vmatprep.subr.bf16.mxu0 %v1990
    %2201 = vmatpush2.bf16.msra.mxu0 %v1989
    %2202 = vmatprep.subr.bf16.mxu0 %v1982
    %2203 = vmatpush2.bf16.msra.mxu0 %v1981
    %2204 = vmatprep.subr.bf16.mxu0 %v1974
    %2205 = vmatpush2.bf16.msra.mxu0 %v1973
    %2206 = vmatprep.subr.bf16.mxu0 %v1966
    %2207 = vmatpush2.bf16.msra.mxu0 %v1965
    %2208 = vmatprep.subr.bf16.mxu0 %v1958
    %2209 = vmatpush2.bf16.msra.mxu0 %v1957
    %2210 = vmatprep.subr.bf16.mxu0 %v1950
    %2211 = vmatpush2.bf16.msra.mxu0 %v1949
    %2212 = vmatprep.mubr.bf16.mxu0 %v1328
    %2213 = vmatmul.mubr.bf16.gmra.mxu0 %v1327
    %v2214 = vpop.f32.mrf.mxu0
    %v2215 = vadd.f32 %v1470, %v2214
    %v2216 = vpop.f32.mrf.mxu0
    %v2217 = vadd.f32 %v1474, %v2216
    %v2218 = vpop.f32.mrf.mxu0
    %v2219 = vpop.f32.mrf.mxu0
    %2220 = vdwg.mxu0
    %2221 = vmatprep.subr.bf16.mxu0 %v1944
    %2222 = vmatpush1.bf16.msra.mxu0 %v1943
    %2223 = vmatprep.subr.bf16.mxu0 %v1936
    %2224 = vmatpush1.bf16.msra.mxu0 %v1935
    %2225 = vmatprep.subr.bf16.mxu0 %v1928
    %2226 = vmatpush1.bf16.msra.mxu0 %v1927
    %2227 = vmatprep.subr.bf16.mxu0 %v1920
    %2228 = vmatpush1.bf16.msra.mxu0 %v1919
    %2229 = vmatprep.subr.bf16.mxu0 %v1912
    %2230 = vmatpush1.bf16.msra.mxu0 %v1911
    %2231 = vmatprep.subr.bf16.mxu0 %v1904
    %2232 = vmatpush1.bf16.msra.mxu0 %v1903
    %2233 = vmatprep.subr.bf16.mxu0 %v1896
    %2234 = vmatpush1.bf16.msra.mxu0 %v1895
    %2235 = vmatprep.subr.bf16.mxu0 %v1888
    %2236 = vmatpush1.bf16.msra.mxu0 %v1887
    %2237 = vmatprep.subr.bf16.mxu0 %v2008
    %2238 = vmatpush2.bf16.msra.mxu0 %v2007
    %2239 = vmatprep.subr.bf16.mxu0 %v2000
    %2240 = vmatpush2.bf16.msra.mxu0 %v1999
    %2241 = vmatprep.subr.bf16.mxu0 %v1992
    %2242 = vmatpush2.bf16.msra.mxu0 %v1991
    %2243 = vmatprep.subr.bf16.mxu0 %v1984
    %2244 = vmatpush2.bf16.msra.mxu0 %v1983
    %2245 = vmatprep.subr.bf16.mxu0 %v1976
    %2246 = vmatpush2.bf16.msra.mxu0 %v1975
    %2247 = vmatprep.subr.bf16.mxu0 %v1968
    %2248 = vmatpush2.bf16.msra.mxu0 %v1967
    %2249 = vmatprep.subr.bf16.mxu0 %v1960
    %2250 = vmatpush2.bf16.msra.mxu0 %v1959
    %2251 = vmatprep.subr.bf16.mxu0 %v1952
    %2252 = vmatpush2.bf16.msra.mxu0 %v1951
    %2253 = vmatprep.mubr.bf16.mxu0 %v1328
    %2254 = vmatmul.mubr.bf16.gmra.mxu0 %v1327
    %v2255 = vpop.f32.mrf.mxu0
    %v2256 = vadd.f32 %v1478, %v2255
    %v2257 = vpop.f32.mrf.mxu0
    %v2258 = vadd.f32 %v1482, %v2257
    %v2259 = vpop.f32.mrf.mxu0
    %v2260 = vpop.f32.mrf.mxu0
    %2261 = vdwg.mxu0
    %2262 = vmatprep.subr.bf16.mxu0 %v1946
    %2263 = vmatpush1.bf16.msra.mxu0 %v1945
    %2264 = vmatprep.subr.bf16.mxu0 %v1938
    %2265 = vmatpush1.bf16.msra.mxu0 %v1937
    %2266 = vmatprep.subr.bf16.mxu0 %v1930
    %2267 = vmatpush1.bf16.msra.mxu0 %v1929
    %2268 = vmatprep.subr.bf16.mxu0 %v1922
    %2269 = vmatpush1.bf16.msra.mxu0 %v1921
    %2270 = vmatprep.subr.bf16.mxu0 %v1914
    %2271 = vmatpush1.bf16.msra.mxu0 %v1913
    %2272 = vmatprep.subr.bf16.mxu0 %v1906
    %2273 = vmatpush1.bf16.msra.mxu0 %v1905
    %2274 = vmatprep.subr.bf16.mxu0 %v1898
    %2275 = vmatpush1.bf16.msra.mxu0 %v1897
    %2276 = vmatprep.subr.bf16.mxu0 %v1890
    %2277 = vmatpush1.bf16.msra.mxu0 %v1889
    %2278 = vmatprep.subr.bf16.mxu0 %v2010
    %2279 = vmatpush2.bf16.msra.mxu0 %v2009
    %2280 = vmatprep.subr.bf16.mxu0 %v2002
    %2281 = vmatpush2.bf16.msra.mxu0 %v2001
    %2282 = vmatprep.subr.bf16.mxu0 %v1994
    %2283 = vmatpush2.bf16.msra.mxu0 %v1993
    %2284 = vmatprep.subr.bf16.mxu0 %v1986
    %2285 = vmatpush2.bf16.msra.mxu0 %v1985
    %2286 = vmatprep.subr.bf16.mxu0 %v1978
    %2287 = vmatpush2.bf16.msra.mxu0 %v1977
    %2288 = vmatprep.subr.bf16.mxu0 %v1970
    %2289 = vmatpush2.bf16.msra.mxu0 %v1969
    %2290 = vmatprep.subr.bf16.mxu0 %v1962
    %2291 = vmatpush2.bf16.msra.mxu0 %v1961
    %2292 = vmatprep.subr.bf16.mxu0 %v1954
    %2293 = vmatpush2.bf16.msra.mxu0 %v1953
    %2294 = vmatprep.mubr.bf16.mxu0 %v1328
    %2295 = vmatmul.mubr.bf16.gmra.mxu0 %v1327
    %v2296 = vpop.f32.mrf.mxu0
    %v2297 = vadd.f32 %v1486, %v2296
    %v2298 = vpop.f32.mrf.mxu0
    %v2299 = vadd.f32 %v1490, %v2298
    %v2300 = vpop.f32.mrf.mxu0
    %v2301 = vpop.f32.mrf.mxu0
    %2302 = vdwg.mxu0
    %v2303 = vsub.f32 0.0, %v2174
    %v2304 = vsub.f32 0.0, %v2176
    %v2305 = vsub.f32 0.0, %v2215
    %v2306 = vsub.f32 0.0, %v2217
    %v2307 = vsub.f32 0.0, %v2256
    %v2308 = vsub.f32 0.0, %v2258
    %v2309 = vsub.f32 0.0, %v2297
    %v2310 = vsub.f32 0.0, %v2299
    %v2311 = vmul.f32 %v2303, 1.442695
    %v2312 = vpow.pop %v2311
    %v2313 = vmul.f32 %v2304, 1.442695
    %v2314 = vpow.pop %v2313
    %v2315 = vmul.f32 %v2305, 1.442695
    %v2316 = vpow.pop %v2315
    %v2317 = vmul.f32 %v2306, 1.442695
    %v2318 = vpow.pop %v2317
    %v2319 = vmul.f32 %v2307, 1.442695
    %v2320 = vpow.pop %v2319
    %v2321 = vmul.f32 %v2308, 1.442695
    %v2322 = vpow.pop %v2321
    %v2323 = vmul.f32 %v2309, 1.442695
    %v2324 = vpow.pop %v2323
    %v2325 = vmul.f32 %v2310, 1.442695
    %v2326 = vpow.pop %v2325
    %v2327 = vadd.f32 %v2312, 1.0
    %v2328 = vadd.f32 %v2314, 1.0
    %v2329 = vadd.f32 %v2316, 1.0
    %v2330 = vadd.f32 %v2318, 1.0
    %v2331 = vadd.f32 %v2320, 1.0
    %v2332 = vadd.f32 %v2322, 1.0
    %v2333 = vadd.f32 %v2324, 1.0
    %v2334 = vadd.f32 %v2326, 1.0
    %v2335 = vrcp.pop %v2327
    %v2336 = vrcp.pop %v2328
    %v2337 = vrcp.pop %v2329
    %v2338 = vrcp.pop %v2330
    %v2339 = vrcp.pop %v2331
    %v2340 = vrcp.pop %v2332
    %v2341 = vrcp.pop %v2333
    %v2342 = vrcp.pop %v2334
    %2343 = vst [vmem:[%s10] sm:$0xff] %v1200
    %2344 = vst [vmem:[%s11] sm:$0xff] %v2335
    %2345 = vst [vmem:[%s11 + $0x8] sm:$0xff] %v2336
    %2346 = vst [vmem:[%s11 + $0x10] sm:$0xff] %v2337
    %2347 = vst [vmem:[%s11 + $0x18] sm:$0xff] %v2338
    %2348 = vst [vmem:[%s11 + $0x20] sm:$0xff] %v2339
    %2349 = vst [vmem:[%s11 + $0x28] sm:$0xff] %v2340
    %2350 = vst [vmem:[%s11 + $0x30] sm:$0xff] %v2341
    %2351 = vst [vmem:[%s11 + $0x38] sm:$0xff] %v2342
    // Predicated region
    $region50: #{vae_forward.1} parent=1 // pred_check
      _
    $region51: #{vae_forward.1} parent=1 // pred_check_branch
      %2353 = sbr.rel (0) target = $region53
    $region52: #{vae_forward.1} parent=1 // pred_region
      _
    $region53: #{vae_forward.1} parent=1 // pred_fallthru
      _
    // Predicated region
    $region54: #{vae_forward.1} parent=1 // pred_check
      _
    $region55: #{vae_forward.1} parent=1 // pred_check_branch
      %2355 = sbr.rel (0) target = $region57
    $region56: #{vae_forward.1} parent=1 // pred_region
      _
    $region57: #{vae_forward.1} parent=1 // pred_fallthru
      _
    // Predicated region
    $region58: #{vae_forward.1} parent=1 // pred_check
      _
    $region59: #{vae_forward.1} parent=1 // pred_check_branch
      %2357 = sbr.rel (0) target = $region61
    $region60: #{vae_forward.1} parent=1 // pred_region
      _
    $region61: #{vae_forward.1} parent=1 // pred_fallthru
      _
    // Predicated region
    $region62: #{vae_forward.1} parent=1 // pred_check
      _
    $region63: #{vae_forward.1} parent=1 // pred_check_branch
      %2359 = sbr.rel (0) target = $region65
    $region64: #{vae_forward.1} parent=1 // pred_region
      _
    $region65: #{vae_forward.1} parent=1 // pred_fallthru
      _
    %2360 = vsyncpa [#allocation3], 1
    %2361 = vsyncpa [#allocation5], 1

</llo_original>
